<compile_context>
chip_gen: v7x
topology: tpu7x:2x2x1
jax: 0.10.0
libtpu: 0.0.40
codegen_flags: <defaults>
</compile_context>

<pallas_src>
import jax
import jax.numpy as jnp
from jax import lax
from jax.experimental import pallas as pl
from jax.experimental.pallas import tpu as pltpu

EPS = 1e-5                       # nn.BatchNorm2d default
VMEM_LIMIT = 64 * 1024 * 1024    # explicit cap
ROW_TILE_TARGET = 512            # rows per grid step (multiple of 8)


# ---------------------------------------------------------------------------
# small helpers
# ---------------------------------------------------------------------------
def _pad_to(v, m):
    return ((v + m - 1) // m) * m


def _pad_cols(a, width):
    return jnp.pad(a, ((0, 0), (0, width - a.shape[1])))


def _pad_mat(a, shape):
    return jnp.pad(a, ((0, shape[0] - a.shape[0]), (0, shape[1] - a.shape[1])))


def _pad_vec_row(v, width):
    return jnp.pad(v, (0, width - v.shape[0])).reshape(1, width)


def _full(shape):
    zeros = (0,) * len(shape)
    return pl.BlockSpec(shape, lambda i, _z=zeros: _z)


def _row_tile(total, target=ROW_TILE_TARGET):
    """Largest divisor of `total` that is a multiple of 8 and <= target."""
    if total % 8 != 0 or total <= target:
        return total
    t = (target // 8) * 8
    while t >= 8:
        if total % t == 0:
            return t
        t -= 8
    return total


def _group_tile(n_groups, rows_per_group, target=ROW_TILE_TARGET):
    """Tile = whole groups; pick the most groups whose rows fit the target."""
    gpt = 1
    for d in range(1, n_groups + 1):
        if n_groups % d == 0 and d * rows_per_group <= max(target, rows_per_group):
            gpt = d
    return gpt * rows_per_group


def _moments(y):
    """Per-channel (sum, sum^2) partials of a (rows, C) tile -> (1, 2, C)."""
    s = jnp.sum(y, axis=0, keepdims=True)
    q = jnp.sum(y * y, axis=0, keepdims=True)
    return jnp.concatenate([s, q], axis=0).reshape(1, 2, y.shape[1])


def _bn_fold(stats, gamma, beta, count, cpad):
    """Fold batch stats into a single per-channel scale/shift (plain JAX, tiny)."""
    s = jnp.sum(stats, axis=0)                       # (2, cpad)
    mean = s[0] / count
    var = jnp.maximum(s[1] / count - mean * mean, 0.0)
    g = jnp.pad(gamma, (0, cpad - gamma.shape[0]))
    b = jnp.pad(beta, (0, cpad - beta.shape[0]))
    scale = g * lax.rsqrt(var + EPS)
    shift = b - mean * scale
    return scale.reshape(1, cpad), shift.reshape(1, cpad)


# ---------------------------------------------------------------------------
# Kernel 1: relu(x) -> two fused 1x1 convs (+bias), emits raw outputs + stat partials
# ---------------------------------------------------------------------------
def _dual_1x1_kernel(x_ref, wa_ref, ba_ref, wb_ref, bb_ref,
                     ya_ref, yb_ref, sa_ref, sb_ref):
    x = jnp.maximum(x_ref[...], 0.0).astype(jnp.bfloat16)
    ya = jnp.dot(x, wa_ref[...], preferred_element_type=jnp.float32) + ba_ref[...]
    yb = jnp.dot(x, wb_ref[...], preferred_element_type=jnp.float32) + bb_ref[...]
    ya_ref[...] = ya
    yb_ref[...] = yb
    sa_ref[...] = _moments(ya)
    sb_ref[...] = _moments(yb)


def _dual_1x1(x_rows, wa, ba, wb, bb):
    rows, cin = x_rows.shape
    ca, cb = wa.shape[1], wb.shape[1]
    tile = _row_tile(rows)
    nt = rows // tile
    row_spec = lambda c: pl.BlockSpec((tile, c), lambda i: (i, 0))
    stat_spec = lambda c: pl.BlockSpec((1, 2, c), lambda i: (i, 0, 0))
    return pl.pallas_call(
        _dual_1x1_kernel,
        out_shape=(jax.ShapeDtypeStruct((rows, ca), jnp.float32),
                   jax.ShapeDtypeStruct((rows, cb), jnp.float32),
                   jax.ShapeDtypeStruct((nt, 2, ca), jnp.float32),
                   jax.ShapeDtypeStruct((nt, 2, cb), jnp.float32)),
        grid=(nt,),
        in_specs=[row_spec(cin), _full((cin, ca)), _full((1, ca)),
                  _full((cin, cb)), _full((1, cb))],
        out_specs=(row_spec(ca), row_spec(cb), stat_spec(ca), stat_spec(cb)),
        compiler_params=pltpu.CompilerParams(
            dimension_semantics=("parallel",), vmem_limit_bytes=VMEM_LIMIT),
    )(x_rows, wa, ba, wb, bb)


# ---------------------------------------------------------------------------
# Kernel 2/3: fused [BN-apply + ReLU of previous conv] + 7-tap conv (+bias)
# (taps are shifted 2-D matmuls read from a zero-haloed VMEM scratch)
# ---------------------------------------------------------------------------
def _make_tap_kernel(shifts, halo, tile, cin, cout):
    def kernel(y_ref, m_ref, sc_ref, sh_ref, w_ref, b_ref, o_ref, st_ref, a_scr):
        valid = m_ref[...] > 0.0                                      # (tile, 1)
        a = jnp.maximum(y_ref[...] * sc_ref[...] + sh_ref[...], 0.0)  # BN + ReLU
        a = jnp.where(valid, a, 0.0)                                  # zero conv padding rows
        zero = jnp.zeros((halo, cin), jnp.float32)
        a_scr[0:halo, :] = zero
        a_scr[halo + tile:halo + tile + halo, :] = zero
        a_scr[halo:halo + tile, :] = a
        acc = jnp.zeros((tile, cout), jnp.float32) + b_ref[...]
        for t, s in enumerate(shifts):
            ak = a_scr[halo + s:halo + s + tile, :].astype(jnp.bfloat16)
            acc = acc + jnp.dot(ak, w_ref[t], preferred_element_type=jnp.float32)
        o_ref[...] = acc
        st_ref[...] = _moments(jnp.where(valid, acc, 0.0))            # stats on valid rows only
    return kernel


def _tap_conv(y_rows, mask_rows, scale, shift, w_taps, bias, shifts, tile, halo):
    rows, cin = y_rows.shape
    cout = w_taps.shape[2]
    nt = rows // tile
    kernel = _make_tap_kernel(tuple(int(s) for s in shifts), halo, tile, cin, cout)
    return pl.pallas_call(
        kernel,
        out_shape=(jax.ShapeDtypeStruct((rows, cout), jnp.float32),
                   jax.ShapeDtypeStruct((nt, 2, cout), jnp.float32)),
        grid=(nt,),
        in_specs=[pl.BlockSpec((tile, cin), lambda i: (i, 0)),
                  pl.BlockSpec((tile, 1), lambda i: (i, 0)),
                  _full((1, cin)), _full((1, cin)),
                  _full((7, cin, cout)), _full((1, cout))],
        out_specs=(pl.BlockSpec((tile, cout), lambda i: (i, 0)),
                   pl.BlockSpec((1, 2, cout), lambda i: (i, 0, 0))),
        scratch_shapes=[pltpu.VMEM((tile + 2 * halo, cin), jnp.float32)],
        compiler_params=pltpu.CompilerParams(
            dimension_semantics=("parallel",), vmem_limit_bytes=VMEM_LIMIT),
    )(y_rows, mask_rows, scale, shift, w_taps, bias)


# ---------------------------------------------------------------------------
# Kernel 4: fused [BN+ReLU of both branches] + concat 1x1 conv (384 -> in_size)
# ---------------------------------------------------------------------------
def _concat_1x1_kernel(y1_ref, y2_ref, s1_ref, t1_ref, s2_ref, t2_ref,
                       wa_ref, wb_ref, b_ref, o_ref, st_ref):
    a1 = jnp.maximum(y1_ref[...] * s1_ref[...] + t1_ref[...], 0.0).astype(jnp.bfloat16)
    a2 = jnp.maximum(y2_ref[...] * s2_ref[...] + t2_ref[...], 0.0).astype(jnp.bfloat16)
    y = (jnp.dot(a1, wa_ref[...], preferred_element_type=jnp.float32)
         + jnp.dot(a2, wb_ref[...], preferred_element_type=jnp.float32)
         + b_ref[...])
    o_ref[...] = y
    st_ref[...] = _moments(y)


def _concat_1x1(y1, y2, s1, t1, s2, t2, wa, wb, bias):
    rows, c1 = y1.shape
    c2 = y2.shape[1]
    cout = wa.shape[1]
    tile = _row_tile(rows)
    nt = rows // tile
    return pl.pallas_call(
        _concat_1x1_kernel,
        out_shape=(jax.ShapeDtypeStruct((rows, cout), jnp.float32),
                   jax.ShapeDtypeStruct((nt, 2, cout), jnp.float32)),
        grid=(nt,),
        in_specs=[pl.BlockSpec((tile, c1), lambda i: (i, 0)),
                  pl.BlockSpec((tile, c2), lambda i: (i, 0)),
                  _full((1, c1)), _full((1, c1)),
                  _full((1, c2)), _full((1, c2)),
                  _full((c1, cout)), _full((c2, cout)), _full((1, cout))],
        out_specs=(pl.BlockSpec((tile, cout), lambda i: (i, 0)),
                   pl.BlockSpec((1, 2, cout), lambda i: (i, 0, 0))),
        compiler_params=pltpu.CompilerParams(
            dimension_semantics=("parallel",), vmem_limit_bytes=VMEM_LIMIT),
    )(y1, y2, s1, t1, s2, t2, wa, wb, bias)


# ---------------------------------------------------------------------------
# Kernel 5: BN+ReLU(conv_last) + residual add with relu(x) + final ReLU
# ---------------------------------------------------------------------------
def _residual_kernel(x_ref, y_ref, s_ref, t_ref, o_ref):
    xr = jnp.maximum(x_ref[...], 0.0)
    c = jnp.maximum(y_ref[...] * s_ref[...] + t_ref[...], 0.0)
    o_ref[...] = jnp.maximum(xr + c, 0.0)


def _residual(x_rows, y_rows, scale, shift):
    rows, c = x_rows.shape
    tile = _row_tile(rows)
    nt = rows // tile
    return pl.pallas_call(
        _residual_kernel,
        out_shape=jax.ShapeDtypeStruct((rows, c), jnp.float32),
        grid=(nt,),
        in_specs=[pl.BlockSpec((tile, c), lambda i: (i, 0)),
                  pl.BlockSpec((tile, c), lambda i: (i, 0)),
                  _full((1, c)), _full((1, c))],
        out_specs=pl.BlockSpec((tile, c), lambda i: (i, 0)),
        compiler_params=pltpu.CompilerParams(
            dimension_semantics=("parallel",), vmem_limit_bytes=VMEM_LIMIT),
    )(x_rows, y_rows, scale, shift)


# ---------------------------------------------------------------------------
# Full InceptionResB forward (glue: layout / padding / per-channel BN folding only)
# ---------------------------------------------------------------------------
def inception_res_b_forward(x_nchw, params):
    (w1, b1, g1, be1,
     w2a, b2a, g2a, be2a,
     w2b, b2b, g2b, be2b,
     w2c, b2c, g2c, be2c,
     wl, bl, gl, bel) = params

    N, Ci, H, W = x_nchw.shape
    P = N * H * W
    cip = _pad_to(Ci, 128)
    c1p = _pad_to(192, 128)
    c2ap = _pad_to(128, 128)
    c2bp = _pad_to(160, 128)
    c2cp = _pad_to(192, 128)
    Wp = _pad_to(W + 6, 8)          # W padded by 3|3 for the 1x7 conv, rounded to 8
    f32, bf16 = jnp.float32, jnp.bfloat16

    # channel-last, lane-dense rows
    x_rows = _pad_cols(jnp.transpose(x_nchw, (0, 2, 3, 1)).reshape(P, Ci).astype(f32), cip)

    # weights: OIHW -> (Cin_pad, Cout_pad) [per tap for the 1x7 / 7x1 convs], bf16
    w1m = _pad_mat(w1[:, :, 0, 0].T, (cip, c1p)).astype(bf16)
    w2am = _pad_mat(w2a[:, :, 0, 0].T, (cip, c2ap)).astype(bf16)
    w2bm = jnp.stack([_pad_mat(w2b[:, :, 0, k].T, (c2ap, c2bp)) for k in range(7)]).astype(bf16)
    w2cm = jnp.stack([_pad_mat(w2c[:, :, k, 0].T, (c2bp, c2cp)) for k in range(7)]).astype(bf16)
    wla = _pad_mat(wl[:, 0:192, 0, 0].T, (c1p, cip)).astype(bf16)     # cat half of x1
    wlb = _pad_mat(wl[:, 192:384, 0, 0].T, (c2cp, cip)).astype(bf16)  # cat half of x2

    b1r, b2ar = _pad_vec_row(b1, c1p), _pad_vec_row(b2a, c2ap)
    b2br, b2cr = _pad_vec_row(b2b, c2bp), _pad_vec_row(b2c, c2cp)
    blr = _pad_vec_row(bl, cip)

    # ---- stage 1: relu(x) -> branch-1 1x1 conv and branch-2 first 1x1 conv (fused)
    y1, y2a, st1, st2a = _dual_1x1(x_rows, w1m, b1r, w2am, b2ar)
    s1, t1 = _bn_fold(st1, g1, be1, P, c1p)
    s2a, t2a = _bn_fold(st2a, g2a, be2a, P, c2ap)

    # ---- stage 2: BN+ReLU(y2a) fused with the 1x7 conv (taps = shifts of 1 row)
    # W is physically padded 3|...| so shifts never leak across image rows.
    y2a_rows = jnp.pad(y2a.reshape(N * H, W, c2ap),
                       ((0, 0), (3, Wp - W - 3), (0, 0))).reshape(N * H * Wp, c2ap)
    maskw = ((jnp.arange(Wp) >= 3) & (jnp.arange(Wp) < 3 + W)).astype(f32)
    mask2 = jnp.tile(maskw, N * H).reshape(N * H * Wp, 1)
    tile2 = _group_tile(N * H, Wp)
    y2b, st2b = _tap_conv(y2a_rows, mask2, s2a, t2a, w2bm, b2br,
                          shifts=[k - 3 for k in range(7)], tile=tile2, halo=3)
    s2b, t2b = _bn_fold(st2b, g2b, be2b, P, c2bp)

    # ---- stage 3: BN+ReLU(y2b) fused with the 7x1 conv (taps = shifts of Wp rows)
    # No physical H padding: each grid step handles exactly ONE image, so the
    # zero halo in the VMEM scratch *is* the conv zero padding along H, and every
    # tap read starts on an 8-aligned sublane (shift is a multiple of Wp).
    # TODO(synk): for very large H*W a single image may exceed the row-tile budget;
    # fall back to the physically H-padded variant in that case.
    tile3 = H * Wp                               # one image per grid step (multiple of 8)
    y2c, st2c = _tap_conv(y2b, mask2, s2b, t2b, w2cm, b2cr,
                          shifts=[(k - 3) * Wp for k in range(7)],
                          tile=tile3, halo=3 * Wp)
    s2c, t2c = _bn_fold(st2c, g2c, be2c, P, c2cp)

    # drop the W padding before the concat-1x1 stage
    y2c_c = y2c.reshape(N, H, Wp, c2cp)[:, :, 3:3 + W, :].reshape(P, c2cp)

    # ---- stage 4: BN+ReLU of both branches fused with conv_last (384 -> in_size)
    yl, stl = _concat_1x1(y1, y2c_c, s1, t1, s2c, t2c, wla, wlb, blr)
    sl, tl = _bn_fold(stl, gl, bel, P, cip)

    # ---- stage 5: BN+ReLU(conv_last) + residual add with relu(x) + final ReLU
    out_rows = _residual(x_rows, yl, sl, tl)
    out = out_rows.reshape(N, H, W, cip)[:, :, :, :Ci]
    return jnp.transpose(out, (0, 3, 1, 2))


# ---------------------------------------------------------------------------
# Pure-JAX reference (mirrors the PyTorch module in training mode, f32 precision)
# ---------------------------------------------------------------------------
def _ref_convblock(x, w, b, gamma, beta, pad_hw):
    dn = lax.conv_dimension_numbers(x.shape, w.shape, ("NCHW", "OIHW", "NCHW"))
    y = lax.conv_general_dilated(x, w, (1, 1),
                                 [(pad_hw[0], pad_hw[0]), (pad_hw[1], pad_hw[1])],
                                 dimension_numbers=dn, precision=lax.Precision.HIGHEST)
    y = y + b.reshape(1, -1, 1, 1)
    mean = y.mean(axis=(0, 2, 3), keepdims=True)
    var = ((y - mean) ** 2).mean(axis=(0, 2, 3), keepdims=True)
    y = (y - mean) * lax.rsqrt(var + EPS) * gamma.reshape(1, -1, 1, 1) + beta.reshape(1, -1, 1, 1)
    return jnp.maximum(y, 0.0)


def ref_forward(x, params):
    (w1, b1, g1, be1, w2a, b2a, g2a, be2a, w2b, b2b, g2b, be2b,
     w2c, b2c, g2c, be2c, wl, bl, gl, bel) = params
    xr = jnp.maximum(x, 0.0)
    x1 = _ref_convblock(xr, w1, b1, g1, be1, (0, 0))
    t = _ref_convblock(xr, w2a, b2a, g2a, be2a, (0, 0))
    t = _ref_convblock(t, w2b, b2b, g2b, be2b, (0, 3))
    x2 = _ref_convblock(t, w2c, b2c, g2c, be2c, (3, 0))
    cat = jnp.concatenate([x1, x2], axis=1)
    cl = _ref_convblock(cat, wl, bl, gl, bel, (0, 0))
    return jnp.maximum(xr + cl, 0.0)


if __name__ == "__main__":
    key = jax.random.PRNGKey(0)
    ks = jax.random.split(key, 21)

    # InceptionResB(in_size=8) on a small (4, 8, 16, 16) input
    N, Ci, H, W = 4, 8, 16, 16
    x = jax.random.normal(ks[0], (N, Ci, H, W), jnp.float32)

    def conv_w(k, shape):
        fan_in = shape[1] * shape[2] * shape[3]
        return jax.random.normal(k, shape, jnp.float32) / jnp.sqrt(float(fan_in))

    def vec(k, n, scale=0.1):
        return scale * jax.random.normal(k, (n,), jnp.float32)

    def gam(k, n):
        return 1.0 + vec(k, n)

    params = (
        conv_w(ks[1], (192, Ci, 1, 1)), vec(ks[2], 192), gam(ks[3], 192), vec(ks[4], 192),
        conv_w(ks[5], (128, Ci, 1, 1)), vec(ks[6], 128), gam(ks[7], 128), vec(ks[8], 128),
        conv_w(ks[9], (160, 128, 1, 7)), vec(ks[10], 160), gam(ks[11], 160), vec(ks[12], 160),
        conv_w(ks[13], (192, 160, 7, 1)), vec(ks[14], 192), gam(ks[15], 192), vec(ks[16], 192),
        conv_w(ks[17], (Ci, 384, 1, 1)), vec(ks[18], Ci), gam(ks[19], Ci), vec(ks[20], Ci),
    )

    out = jax.block_until_ready(inception_res_b_forward(x, params))
    ref = ref_forward(x, params)

    assert out.shape == x.shape, (out.shape, x.shape)
    # Kernel uses bf16 MXU operands with f32 accumulation; reference is full f32.
    err = float(jnp.max(jnp.abs(out - ref)))
    assert jnp.allclose(out, ref, rtol=3e-2, atol=3e-2), f"max abs err {err}"
    print("KERNEL_OK")
</pallas_src>

<mosaic_0001>
module attributes {stable_mosaic.version = 11 : i64} {
  func.func @_dual_1x1_kernel(%arg0: i32, %arg1: memref<512x128xf32, #tpu.memory_space<vmem>>, %arg2: memref<128x256xbf16, #tpu.memory_space<vmem>>, %arg3: memref<1x256xf32, #tpu.memory_space<vmem>>, %arg4: memref<128x128xbf16, #tpu.memory_space<vmem>>, %arg5: memref<1x128xf32, #tpu.memory_space<vmem>>, %arg6: memref<512x256xf32, #tpu.memory_space<vmem>>, %arg7: memref<512x128xf32, #tpu.memory_space<vmem>>, %arg8: memref<1x2x256xf32, #tpu.memory_space<vmem>>, %arg9: memref<1x2x128xf32, #tpu.memory_space<vmem>>) attributes {dimension_semantics = [#tpu.dimension_semantics<parallel>], iteration_bounds = array<i64: 2>, scalar_prefetch = 0 : i64, scratch_operands = 0 : i64, tpu.core_type = #tpu.core_type<tc>, window_params = [{transform_indices = @transform_0, window_bounds = array<i64: 512, 128>}, {pipeline_mode = #tpu.pipeline_mode<synchronous>, transform_indices = @transform_1, window_bounds = array<i64: 128, 256>}, {pipeline_mode = #tpu.pipeline_mode<synchronous>, transform_indices = @transform_2, window_bounds = array<i64: 1, 256>}, {pipeline_mode = #tpu.pipeline_mode<synchronous>, transform_indices = @transform_3, window_bounds = array<i64: 128, 128>}, {pipeline_mode = #tpu.pipeline_mode<synchronous>, transform_indices = @transform_4, window_bounds = array<i64: 1, 128>}, {transform_indices = @transform_5, window_bounds = array<i64: 512, 256>}, {transform_indices = @transform_6, window_bounds = array<i64: 512, 128>}, {transform_indices = @transform_7, window_bounds = array<i64: 1, 2, 256>}, {transform_indices = @transform_8, window_bounds = array<i64: 1, 2, 128>}]} {
    %c0 = arith.constant 0 : index
    %c0_0 = arith.constant 0 : index
    %0 = vector.load %arg1[%c0, %c0_0] : memref<512x128xf32, #tpu.memory_space<vmem>>, vector<512x128xf32>
    %cst = arith.constant 0.000000e+00 : f32
    %1 = vector.broadcast %cst : f32 to vector<512x128xf32>
    %2 = arith.maximumf %0, %1 : vector<512x128xf32>
    %3 = arith.truncf %2 : vector<512x128xf32> to vector<512x128xbf16>
    %c0_1 = arith.constant 0 : index
    %c0_2 = arith.constant 0 : index
    %4 = vector.load %arg2[%c0_1, %c0_2] : memref<128x256xbf16, #tpu.memory_space<vmem>>, vector<128x256xbf16>
    %cst_3 = arith.constant dense<0.000000e+00> : vector<512x256xf32>
    %5 = tpu.matmul %3, %4, %cst_3 {dimension_numbers = #tpu.dot_dimension_numbers<[1], [0], [0], [1], [0, 0, 1, 1], [], []>} : vector<512x128xbf16>, vector<128x256xbf16>, vector<512x256xf32> -> vector<512x256xf32>
    %c0_4 = arith.constant 0 : index
    %c0_5 = arith.constant 0 : index
    %6 = vector.load %arg3[%c0_4, %c0_5] : memref<1x256xf32, #tpu.memory_space<vmem>>, vector<1x256xf32>
    %7 = vector.broadcast %6 : vector<1x256xf32> to vector<512x256xf32>
    %8 = arith.addf %5, %7 : vector<512x256xf32>
    %c0_6 = arith.constant 0 : index
    %c0_7 = arith.constant 0 : index
    %9 = vector.load %arg4[%c0_6, %c0_7] : memref<128x128xbf16, #tpu.memory_space<vmem>>, vector<128x128xbf16>
    %cst_8 = arith.constant dense<0.000000e+00> : vector<512x128xf32>
    %10 = tpu.matmul %3, %9, %cst_8 {dimension_numbers = #tpu.dot_dimension_numbers<[1], [0], [0], [1], [0, 0, 1, 1], [], []>} : vector<512x128xbf16>, vector<128x128xbf16>, vector<512x128xf32> -> vector<512x128xf32>
    %c0_9 = arith.constant 0 : index
    %c0_10 = arith.constant 0 : index
    %11 = vector.load %arg5[%c0_9, %c0_10] : memref<1x128xf32, #tpu.memory_space<vmem>>, vector<1x128xf32>
    %12 = vector.broadcast %11 : vector<1x128xf32> to vector<512x128xf32>
    %13 = arith.addf %10, %12 : vector<512x128xf32>
    %c0_11 = arith.constant 0 : index
    %c0_12 = arith.constant 0 : index
    %14 = vector.load %arg6[%c0_11, %c0_12] : memref<512x256xf32, #tpu.memory_space<vmem>>, vector<512x256xf32>
    tpu.vector_store %arg6[%c0_11, %c0_12], %8 {strides = array<i32>} : memref<512x256xf32, #tpu.memory_space<vmem>>, vector<512x256xf32>,
    %c0_13 = arith.constant 0 : index
    %c0_14 = arith.constant 0 : index
    %15 = vector.load %arg7[%c0_13, %c0_14] : memref<512x128xf32, #tpu.memory_space<vmem>>, vector<512x128xf32>
    tpu.vector_store %arg7[%c0_13, %c0_14], %13 {strides = array<i32>} : memref<512x128xf32, #tpu.memory_space<vmem>>, vector<512x128xf32>,
    %cst_15 = arith.constant dense<0.000000e+00> : vector<256xf32>
    %16 = vector.multi_reduction <add>, %8, %cst_15 [0] : vector<512x256xf32> to vector<256xf32>
    %17 = vector.shape_cast %16 : vector<256xf32> to vector<1x256xf32>
    %18 = arith.mulf %8, %8 : vector<512x256xf32>
    %cst_16 = arith.constant dense<0.000000e+00> : vector<256xf32>
    %19 = vector.multi_reduction <add>, %18, %cst_16 [0] : vector<512x256xf32> to vector<256xf32>
    %20 = vector.shape_cast %19 : vector<256xf32> to vector<1x256xf32>
    %21 = tpu.concatenate %17, %20 in 0 : vector<1x256xf32>, vector<1x256xf32> -> vector<2x256xf32>
    %22 = vector.shape_cast %21 : vector<2x256xf32> to vector<1x2x256xf32>
    %c0_17 = arith.constant 0 : index
    %c0_18 = arith.constant 0 : index
    %c0_19 = arith.constant 0 : index
    %23 = vector.load %arg8[%c0_17, %c0_18, %c0_19] : memref<1x2x256xf32, #tpu.memory_space<vmem>>, vector<1x2x256xf32>
    tpu.vector_store %arg8[%c0_17, %c0_18, %c0_19], %22 {strides = array<i32>} : memref<1x2x256xf32, #tpu.memory_space<vmem>>, vector<1x2x256xf32>,
    %cst_20 = arith.constant dense<0.000000e+00> : vector<128xf32>
    %24 = vector.multi_reduction <add>, %13, %cst_20 [0] : vector<512x128xf32> to vector<128xf32>
    %25 = vector.shape_cast %24 : vector<128xf32> to vector<1x128xf32>
    %26 = arith.mulf %13, %13 : vector<512x128xf32>
    %cst_21 = arith.constant dense<0.000000e+00> : vector<128xf32>
    %27 = vector.multi_reduction <add>, %26, %cst_21 [0] : vector<512x128xf32> to vector<128xf32>
    %28 = vector.shape_cast %27 : vector<128xf32> to vector<1x128xf32>
    %29 = tpu.concatenate %25, %28 in 0 : vector<1x128xf32>, vector<1x128xf32> -> vector<2x128xf32>
    %30 = vector.shape_cast %29 : vector<2x128xf32> to vector<1x2x128xf32>
    %c0_22 = arith.constant 0 : index
    %c0_23 = arith.constant 0 : index
    %c0_24 = arith.constant 0 : index
    %31 = vector.load %arg9[%c0_22, %c0_23, %c0_24] : memref<1x2x128xf32, #tpu.memory_space<vmem>>, vector<1x2x128xf32>
    tpu.vector_store %arg9[%c0_22, %c0_23, %c0_24], %30 {strides = array<i32>} : memref<1x2x128xf32, #tpu.memory_space<vmem>>, vector<1x2x128xf32>,
    return
  }
  func.func @transform_0(%arg0: i32) -> (i32, i32) {
    %c0_i32 = arith.constant 0 : i32
    %c0_i32_0 = arith.constant 0 : i32
    return %arg0, %c0_i32 : i32, i32
  }
  func.func @transform_1(%arg0: i32) -> (i32, i32) {
    %c0_i32 = arith.constant 0 : i32
    %c0_i32_0 = arith.constant 0 : i32
    %c0_i32_1 = arith.constant 0 : i32
    return %c0_i32, %c0_i32_0 : i32, i32
  }
  func.func @transform_2(%arg0: i32) -> (i32, i32) {
    %c0_i32 = arith.constant 0 : i32
    %c0_i32_0 = arith.constant 0 : i32
    %c0_i32_1 = arith.constant 0 : i32
    return %c0_i32, %c0_i32_0 : i32, i32
  }
  func.func @transform_3(%arg0: i32) -> (i32, i32) {
    %c0_i32 = arith.constant 0 : i32
    %c0_i32_0 = arith.constant 0 : i32
    %c0_i32_1 = arith.constant 0 : i32
    return %c0_i32, %c0_i32_0 : i32, i32
  }
  func.func @transform_4(%arg0: i32) -> (i32, i32) {
    %c0_i32 = arith.constant 0 : i32
    %c0_i32_0 = arith.constant 0 : i32
    %c0_i32_1 = arith.constant 0 : i32
    return %c0_i32, %c0_i32_0 : i32, i32
  }
  func.func @transform_5(%arg0: i32) -> (i32, i32) {
    %c0_i32 = arith.constant 0 : i32
    %c0_i32_0 = arith.constant 0 : i32
    return %arg0, %c0_i32 : i32, i32
  }
  func.func @transform_6(%arg0: i32) -> (i32, i32) {
    %c0_i32 = arith.constant 0 : i32
    %c0_i32_0 = arith.constant 0 : i32
    return %arg0, %c0_i32 : i32, i32
  }
  func.func @transform_7(%arg0: i32) -> (i32, i32, i32) {
    %c0_i32 = arith.constant 0 : i32
    %c0_i32_0 = arith.constant 0 : i32
    %c0_i32_1 = arith.constant 0 : i32
    return %arg0, %c0_i32, %c0_i32_0 : i32, i32, i32
  }
  func.func @transform_8(%arg0: i32) -> (i32, i32, i32) {
    %c0_i32 = arith.constant 0 : i32
    %c0_i32_0 = arith.constant 0 : i32
    %c0_i32_1 = arith.constant 0 : i32
    return %arg0, %c0_i32, %c0_i32_0 : i32, i32, i32
  }
}

</mosaic_0001>

<llo_original>
// kernel: tpu_custom_call.1
$region0: #{tpu_custom_call.1}
  #allocation0 [shape = 'u32[]', space=smem, size = 0x4, offset = 0x4, fixed_abs, tag = 'smem constant byte address 0x4 - core index']
  #allocation1 [shape = 'u32[144,128]{1,0:T(1,128)}', space=vmem, size = 0x12000, scoped, tag = 'internal scratch']
  %s0 = inlined_call_operand.hbm [shape: f32[1024,128], index: 0, kind: input, shape index: {}]
  %s1 = inlined_call_operand.hbm [shape: bf16[128,256], index: 1, kind: input, shape index: {}]
  %s2 = inlined_call_operand.hbm [shape: f32[1,256], index: 2, kind: input, shape index: {}]
  %s3 = inlined_call_operand.hbm [shape: bf16[128,128], index: 3, kind: input, shape index: {}]
  %s4 = inlined_call_operand.hbm [shape: f32[1,128], index: 4, kind: input, shape index: {}]
  %s5 = inlined_call_operand.hbm [shape: f32[1024,256], index: 5, kind: output, shape index: {0}]
  %s6 = inlined_call_operand.hbm [shape: f32[1024,128], index: 6, kind: output, shape index: {1}]
  %s7 = inlined_call_operand.hbm [shape: f32[2,2,256], index: 7, kind: output, shape index: {2}]
  %s8 = inlined_call_operand.hbm [shape: f32[2,2,128], index: 8, kind: output, shape index: {3}]
  %9 = xla_tuple %s5, %s6, %s7, %s8
  %s10 = sld [smem:[#allocation0]]
  $region97: #{tpu_custom_call.1} parent=0
    _
  %s12 = ssub.s32 1, %s10
  %s13 = scalar_select 0, %s12, %s10
  $region1: #{tpu_custom_call.1} parent=0
    #allocation2 [shape = 'u8[524288]{0}', space=vmem, size = 0x80000, scoped, tag = 'input window, operand 0']
    #allocation3 [shape = 's32[2]{0}', space=sflag, size = 0x8, scoped, tag = 'scoped memory for tpu_custom_call.1']
    #allocation4 [shape = 's32[2]{0}', space=sflag, size = 0x8, scoped, tag = 'scoped memory for tpu_custom_call.1']
    #allocation5 [shape = 'u8[65536]{0}', space=vmem, size = 0x10000, scoped, tag = 'input window, operand 1, single buffered']
    #allocation6 [shape = 's32[1]{0}', space=sflag, size = 0x4, scoped, tag = 'scoped memory for tpu_custom_call.1']
    #allocation7 [shape = 'u8[1024]{0}', space=vmem, size = 0x400, scoped, tag = 'input window, operand 2, single buffered']
    #allocation8 [shape = 'u8[32768]{0}', space=vmem, size = 0x8000, scoped, tag = 'input window, operand 3, single buffered']
    #allocation9 [shape = 's32[1]{0}', space=sflag, size = 0x4, scoped, tag = 'scoped memory for tpu_custom_call.1']
    #allocation10 [shape = 'u8[512]{0}', space=vmem, size = 0x400, scoped, tag = 'input window, operand 4, single buffered']
    #allocation11 [shape = 'u8[1048576]{0}', space=vmem, size = 0x100000, scoped, tag = 'output window, operand 0']
    #allocation12 [shape = 'u8[524288]{0}', space=vmem, size = 0x80000, scoped, tag = 'output window, operand 1']
    #allocation13 [shape = 's32[2]{0}', space=sflag, size = 0x8, scoped, tag = 'scoped memory for tpu_custom_call.1']
    #allocation14 [shape = 'u8[4096]{0}', space=vmem, size = 0x1000, scoped, tag = 'output window, operand 2']
    #allocation15 [shape = 'u8[2048]{0}', space=vmem, size = 0x800, scoped, tag = 'output window, operand 3']
    #allocation16 [shape = 's32[2]{0}', space=sflag, size = 0x8, scoped, tag = 'scoped memory for tpu_custom_call.1']
    %14 = vsyncpa [#allocation3], 0
    %s15 = scalar_lea.sflag [#allocation3], 1
    %16 = vsyncpa %s15, 0
    %17 = vsyncpa [#allocation6], 0
    %18 = vsyncpa [#allocation9], 0
    %19 = vsyncpa [#allocation4], 0
    %s20 = scalar_lea.sflag [#allocation4], 1
    %21 = vsyncpa %s20, 0
    %22 = vsyncpa [#allocation13], 0
    %s23 = scalar_lea.sflag [#allocation13], 1
    %24 = vsyncpa %s23, 0
    %25 = vsyncpa [#allocation16], 0
    %s26 = scalar_lea.sflag [#allocation16], 1
    %27 = vsyncpa %s26, 0
    loop: start=0, step=1, limit=4
    $region2: #{tpu_custom_call.1} parent=1 // loop_pre_header
      _
    $region3: #{tpu_custom_call.1} parent=1 // loop_header
      %s29 = sphi 0, %s33
      %p30 = scmp.ge.s32.totalorder %s29, 4
      %s39 = sphi 0, %s41
      %s42 = sphi 0, %s39
      %s43 = sphi 0, %s42
      %s59 = sphi 0, %s43
      %s63 = sphi 0, %s63
      %s65 = sphi 0, %s63
      %s66 = sphi 0, %s65
      %s80 = sphi 0, %s66
      %s84 = sphi 0, %s84
      %s86 = sphi 0, %s84
      %s87 = sphi 0, %s86
      %s101 = sphi 0, %s87
      %s105 = sphi 0, %s105
      %s107 = sphi 0, %s105
      %s108 = sphi 0, %s107
      %s122 = sphi 0, %s108
      %s126 = sphi 0, %s126
      %s128 = sphi 0, %s126
      %s129 = sphi 0, %s128
      %s143 = sphi 0, %s129
      %s149 = sphi 0, %s151
      %s152 = sphi 0, %s149
      %s153 = sphi 0, %s152
      %s169 = sphi 0, %s153
      %s175 = sphi 0, %s177
      %s178 = sphi 0, %s175
      %s179 = sphi 0, %s178
      %s195 = sphi 0, %s179
      %s201 = sphi 0, %s203
      %s204 = sphi 0, %s201
      %s205 = sphi 0, %s204
      %s221 = sphi 0, %s205
      %s227 = sphi 0, %s229
      %s230 = sphi 0, %s227
      %s231 = sphi 0, %s230
      %s247 = sphi 0, %s231
    $region4: #{tpu_custom_call.1} parent=1 // loop_header_branch
      %32 = sbr.rel (%p30) target = $region8
    $region5: #{tpu_custom_call.1} parent=1 // loop_body
      %s34 = ssub.s32 %s29, 1
      %s35 = ssub.s32 %s29, 2
      %s36 = sadd.s32 %s29, 1
      %s37 = ssub.s32 %s29, %s36
      %p38 = scmp.eq.s32.totalorder %s37, 0
      %s40 = sadd.s32 %s39, 1
      %s41 = scalar_select %p38, %s39, %s40
      %p44 = pneg %p38
      %p45 = scmp.eq.s32.totalorder %s29, 1
      %p46 = por %p44, %p45
      %p47 = scmp.ne.s32.totalorder %s39, %s42
      %p48 = scmp.eq.s32.totalorder %s29, 0
      %p49 = por %p47, %p48
      %p50 = scmp.ne.s32.totalorder %s39, %s42
      %p51 = scmp.eq.s32.totalorder %s34, 1
      %p52 = por %p50, %p51
      %p53 = scmp.ne.s32.totalorder %s42, %s43
      %p54 = scmp.eq.s32.totalorder %s34, 0
      %p55 = por %p53, %p54
      %p56 = scmp.ne.s32.totalorder %s42, %s43
      %p57 = scmp.eq.s32.totalorder %s35, 1
      %p58 = por %p56, %p57
      %p60 = scmp.ne.s32.totalorder %s43, %s59
      %p61 = scmp.eq.s32.totalorder %s35, 0
      %p62 = por %p60, %p61
      %s64 = sadd.s32 %s63, 1
      %p67 = scmp.eq.s32.totalorder %s29, 1
      %p68 = scmp.ne.s32.totalorder %s63, %s65
      %p69 = scmp.eq.s32.totalorder %s29, 0
      %p70 = por %p68, %p69
      %p71 = scmp.ne.s32.totalorder %s63, %s65
      %p72 = scmp.eq.s32.totalorder %s34, 1
      %p73 = por %p71, %p72
      %p74 = scmp.ne.s32.totalorder %s65, %s66
      %p75 = scmp.eq.s32.totalorder %s34, 0
      %p76 = por %p74, %p75
      %p77 = scmp.ne.s32.totalorder %s65, %s66
      %p78 = scmp.eq.s32.totalorder %s35, 1
      %p79 = por %p77, %p78
      %p81 = scmp.ne.s32.totalorder %s66, %s80
      %p82 = scmp.eq.s32.totalorder %s35, 0
      %p83 = por %p81, %p82
      %s85 = sadd.s32 %s84, 1
      %p88 = scmp.eq.s32.totalorder %s29, 1
      %p89 = scmp.ne.s32.totalorder %s84, %s86
      %p90 = scmp.eq.s32.totalorder %s29, 0
      %p91 = por %p89, %p90
      %p92 = scmp.ne.s32.totalorder %s84, %s86
      %p93 = scmp.eq.s32.totalorder %s34, 1
      %p94 = por %p92, %p93
      %p95 = scmp.ne.s32.totalorder %s86, %s87
      %p96 = scmp.eq.s32.totalorder %s34, 0
      %p97 = por %p95, %p96
      %p98 = scmp.ne.s32.totalorder %s86, %s87
      %p99 = scmp.eq.s32.totalorder %s35, 1
      %p100 = por %p98, %p99
      %p102 = scmp.ne.s32.totalorder %s87, %s101
      %p103 = scmp.eq.s32.totalorder %s35, 0
      %p104 = por %p102, %p103
      %s106 = sadd.s32 %s105, 1
      %p109 = scmp.eq.s32.totalorder %s29, 1
      %p110 = scmp.ne.s32.totalorder %s105, %s107
      %p111 = scmp.eq.s32.totalorder %s29, 0
      %p112 = por %p110, %p111
      %p113 = scmp.ne.s32.totalorder %s105, %s107
      %p114 = scmp.eq.s32.totalorder %s34, 1
      %p115 = por %p113, %p114
      %p116 = scmp.ne.s32.totalorder %s107, %s108
      %p117 = scmp.eq.s32.totalorder %s34, 0
      %p118 = por %p116, %p117
      %p119 = scmp.ne.s32.totalorder %s107, %s108
      %p120 = scmp.eq.s32.totalorder %s35, 1
      %p121 = por %p119, %p120
      %p123 = scmp.ne.s32.totalorder %s108, %s122
      %p124 = scmp.eq.s32.totalorder %s35, 0
      %p125 = por %p123, %p124
      %s127 = sadd.s32 %s126, 1
      %p130 = scmp.eq.s32.totalorder %s29, 1
      %p131 = scmp.ne.s32.totalorder %s126, %s128
      %p132 = scmp.eq.s32.totalorder %s29, 0
      %p133 = por %p131, %p132
      %p134 = scmp.ne.s32.totalorder %s126, %s128
      %p135 = scmp.eq.s32.totalorder %s34, 1
      %p136 = por %p134, %p135
      %p137 = scmp.ne.s32.totalorder %s128, %s129
      %p138 = scmp.eq.s32.totalorder %s34, 0
      %p139 = por %p137, %p138
      %p140 = scmp.ne.s32.totalorder %s128, %s129
      %p141 = scmp.eq.s32.totalorder %s35, 1
      %p142 = por %p140, %p141
      %p144 = scmp.ne.s32.totalorder %s129, %s143
      %p145 = scmp.eq.s32.totalorder %s35, 0
      %p146 = por %p144, %p145
      %s147 = ssub.s32 %s29, %s36
      %p148 = scmp.eq.s32.totalorder %s147, 0
      %s150 = sadd.s32 %s149, 1
      %s151 = scalar_select %p148, %s149, %s150
      %p154 = pneg %p148
      %p155 = scmp.eq.s32.totalorder %s29, 1
      %p156 = por %p154, %p155
      %p157 = scmp.ne.s32.totalorder %s149, %s152
      %p158 = scmp.eq.s32.totalorder %s29, 0
      %p159 = por %p157, %p158
      %p160 = scmp.ne.s32.totalorder %s149, %s152
      %p161 = scmp.eq.s32.totalorder %s34, 1
      %p162 = por %p160, %p161
      %p163 = scmp.ne.s32.totalorder %s152, %s153
      %p164 = scmp.eq.s32.totalorder %s34, 0
      %p165 = por %p163, %p164
      %p166 = scmp.ne.s32.totalorder %s152, %s153
      %p167 = scmp.eq.s32.totalorder %s35, 1
      %p168 = por %p166, %p167
      %p170 = scmp.ne.s32.totalorder %s153, %s169
      %p171 = scmp.eq.s32.totalorder %s35, 0
      %p172 = por %p170, %p171
      %s173 = ssub.s32 %s29, %s36
      %p174 = scmp.eq.s32.totalorder %s173, 0
      %s176 = sadd.s32 %s175, 1
      %s177 = scalar_select %p174, %s175, %s176
      %p180 = pneg %p174
      %p181 = scmp.eq.s32.totalorder %s29, 1
      %p182 = por %p180, %p181
      %p183 = scmp.ne.s32.totalorder %s175, %s178
      %p184 = scmp.eq.s32.totalorder %s29, 0
      %p185 = por %p183, %p184
      %p186 = scmp.ne.s32.totalorder %s175, %s178
      %p187 = scmp.eq.s32.totalorder %s34, 1
      %p188 = por %p186, %p187
      %p189 = scmp.ne.s32.totalorder %s178, %s179
      %p190 = scmp.eq.s32.totalorder %s34, 0
      %p191 = por %p189, %p190
      %p192 = scmp.ne.s32.totalorder %s178, %s179
      %p193 = scmp.eq.s32.totalorder %s35, 1
      %p194 = por %p192, %p193
      %p196 = scmp.ne.s32.totalorder %s179, %s195
      %p197 = scmp.eq.s32.totalorder %s35, 0
      %p198 = por %p196, %p197
      %s199 = ssub.s32 %s29, %s36
      %p200 = scmp.eq.s32.totalorder %s199, 0
      %s202 = sadd.s32 %s201, 1
      %s203 = scalar_select %p200, %s201, %s202
      %p206 = pneg %p200
      %p207 = scmp.eq.s32.totalorder %s29, 1
      %p208 = por %p206, %p207
      %p209 = scmp.ne.s32.totalorder %s201, %s204
      %p210 = scmp.eq.s32.totalorder %s29, 0
      %p211 = por %p209, %p210
      %p212 = scmp.ne.s32.totalorder %s201, %s204
      %p213 = scmp.eq.s32.totalorder %s34, 1
      %p214 = por %p212, %p213
      %p215 = scmp.ne.s32.totalorder %s204, %s205
      %p216 = scmp.eq.s32.totalorder %s34, 0
      %p217 = por %p215, %p216
      %p218 = scmp.ne.s32.totalorder %s204, %s205
      %p219 = scmp.eq.s32.totalorder %s35, 1
      %p220 = por %p218, %p219
      %p222 = scmp.ne.s32.totalorder %s205, %s221
      %p223 = scmp.eq.s32.totalorder %s35, 0
      %p224 = por %p222, %p223
      %s225 = ssub.s32 %s29, %s36
      %p226 = scmp.eq.s32.totalorder %s225, 0
      %s228 = sadd.s32 %s227, 1
      %s229 = scalar_select %p226, %s227, %s228
      %p232 = pneg %p226
      %p233 = scmp.eq.s32.totalorder %s29, 1
      %p234 = por %p232, %p233
      %p235 = scmp.ne.s32.totalorder %s227, %s230
      %p236 = scmp.eq.s32.totalorder %s29, 0
      %p237 = por %p235, %p236
      %p238 = scmp.ne.s32.totalorder %s227, %s230
      %p239 = scmp.eq.s32.totalorder %s34, 1
      %p240 = por %p238, %p239
      %p241 = scmp.ne.s32.totalorder %s230, %s231
      %p242 = scmp.eq.s32.totalorder %s34, 0
      %p243 = por %p241, %p242
      %p244 = scmp.ne.s32.totalorder %s230, %s231
      %p245 = scmp.eq.s32.totalorder %s35, 1
      %p246 = por %p244, %p245
      %p248 = scmp.ne.s32.totalorder %s231, %s247
      %p249 = scmp.eq.s32.totalorder %s35, 0
      %p250 = por %p248, %p249
      %p251 = scmp.le.s32.totalorder 1, %s29
      %p252 = scmp.lt.s32.totalorder %s29, 3
      %p253 = pnand %p251, %p252
      %p254 = pneg %p253
      // Predicated region
      $region9: #{tpu_custom_call.1} parent=5 // pred_check
        _
      $region10: #{tpu_custom_call.1} parent=5 // pred_check_branch
        %256 = sbr.rel (%p253) target = $region12
      $region11: #{tpu_custom_call.1} parent=5 // pred_region
        %s257 = ssub.s32 %s29, 1
        // Predicated region
        $region13: #{tpu_custom_call.1} parent=11 // pred_check
          %p258 = pneg %p76
        $region14: #{tpu_custom_call.1} parent=11 // pred_check_branch
          %260 = sbr.rel (%p258) target = $region16
        $region15: #{tpu_custom_call.1} parent=11 // pred_region
          %s262 = ssub.s32 2048, 2048
          %263 = vsyncadd [#allocation6], %s262
          %s264 = sshll.u32 [#allocation5], 4
          %s265 = int_to_ptr.vmem [resolvable:$true] %s264
          %270 = dma.hbm_to_vmem [thread:$0]  %s1, 2048, %s265, [#allocation6], 128, 128, 8
        $region16: #{tpu_custom_call.1} parent=11 // pred_fallthru
          _
        // Predicated region
        $region17: #{tpu_custom_call.1} parent=11 // pred_check
          %p271 = pneg %p97
        $region18: #{tpu_custom_call.1} parent=11 // pred_check_branch
          %273 = sbr.rel (%p271) target = $region20
        $region19: #{tpu_custom_call.1} parent=11 // pred_region
          %s275 = ssub.s32 32, 32
          %276 = vsyncadd [#allocation6], %s275
          %s278 = sshll.u32 [#allocation7], 4
          %s279 = int_to_ptr.vmem [resolvable:$true] %s278
          %281 = dma.hbm_to_vmem [thread:$0]  %s2, 32, %s279, [#allocation6]
        $region20: #{tpu_custom_call.1} parent=11 // pred_fallthru
          _
        // Predicated region
        $region21: #{tpu_custom_call.1} parent=11 // pred_check
          %p282 = pneg %p118
        $region22: #{tpu_custom_call.1} parent=11 // pred_check_branch
          %284 = sbr.rel (%p282) target = $region24
        $region23: #{tpu_custom_call.1} parent=11 // pred_region
          %s286 = ssub.s32 1024, 1024
          %287 = vsyncadd [#allocation9], %s286
          %s288 = sshll.u32 [#allocation8], 4
          %s289 = int_to_ptr.vmem [resolvable:$true] %s288
          %294 = dma.hbm_to_vmem [thread:$0]  %s3, 1024, %s289, [#allocation9], 64, 64, 4
        $region24: #{tpu_custom_call.1} parent=11 // pred_fallthru
          _
        // Predicated region
        $region25: #{tpu_custom_call.1} parent=11 // pred_check
          %p295 = pneg %p139
        $region26: #{tpu_custom_call.1} parent=11 // pred_check_branch
          %297 = sbr.rel (%p295) target = $region28
        $region27: #{tpu_custom_call.1} parent=11 // pred_region
          %s299 = ssub.s32 16, 16
          %300 = vsyncadd [#allocation9], %s299
          %s302 = sshll.u32 [#allocation10], 4
          %s303 = int_to_ptr.vmem [resolvable:$true] %s302
          %305 = dma.hbm_to_vmem [thread:$0]  %s4, 16, %s303, [#allocation9]
        $region28: #{tpu_custom_call.1} parent=11 // pred_fallthru
          _
      $region12: #{tpu_custom_call.1} parent=5 // pred_fallthru
        _
      %p306 = scmp.lt.s32.totalorder %s29, 2
      // Predicated region
      $region29: #{tpu_custom_call.1} parent=5 // pred_check
        %p307 = pneg %p306
      $region30: #{tpu_custom_call.1} parent=5 // pred_check_branch
        %309 = sbr.rel (%p307) target = $region32
      $region31: #{tpu_custom_call.1} parent=5 // pred_region
        // Predicated region
        $region33: #{tpu_custom_call.1} parent=31 // pred_check
          %p310 = pneg %p49
        $region34: #{tpu_custom_call.1} parent=31 // pred_check_branch
          %312 = sbr.rel (%p310) target = $region36
        $region35: #{tpu_custom_call.1} parent=31 // pred_region
          %s313 = sand.u32 %s39, 1
          %s314 = scalar_lea.sflag [#allocation3], %s313
          %s315 = sand.u32 %s39, 1
          %s316 = smul.addr %s315, 512
          %s317 = scalar_lea.vmem [#allocation2], %s316
          %s318 = smul.u32 64, %s29
          %s320 = ssub.s32 8192, 8192
          %321 = vsyncadd %s314, %s320
          %s322 = smul.addr %s318, 128
          %s323 = scalar_lea.hbm %s0, %s322
          %s324 = sshll.u32 %s317, 4
          %s325 = int_to_ptr.vmem [resolvable:$true] %s324
          %330 = dma.hbm_to_vmem [thread:$0]  %s323, 8192, %s325, %s314, 128, 128, 8
        $region36: #{tpu_custom_call.1} parent=31 // pred_fallthru
          _
      $region32: #{tpu_custom_call.1} parent=5 // pred_fallthru
        _
      %p331 = scmp.le.s32.totalorder 1, %s29
      %p332 = scmp.lt.s32.totalorder %s29, 3
      %p333 = pnand %p331, %p332
      %p334 = pneg %p333
      // Predicated region
      $region37: #{tpu_custom_call.1} parent=5 // pred_check
        _
      $region38: #{tpu_custom_call.1} parent=5 // pred_check_branch
        %336 = sbr.rel (%p333) target = $region40
      $region39: #{tpu_custom_call.1} parent=5 // pred_region
        %s337 = ssub.s32 %s29, 1
        %s338 = sand.u32 %s42, 1
        %s339 = scalar_lea.sflag [#allocation3], %s338
        %s340 = sand.u32 %s42, 1
        %s341 = smul.addr %s340, 512
        %s342 = scalar_lea.vmem [#allocation2], %s341
        // Predicated region
        $region41: #{tpu_custom_call.1} parent=39 // pred_check
          %p343 = pneg %p55
        $region42: #{tpu_custom_call.1} parent=39 // pred_check_branch
          %345 = sbr.rel (%p343) target = $region44
        $region43: #{tpu_custom_call.1} parent=39 // pred_region
          %346 = dma.done %s339, 8192
        $region44: #{tpu_custom_call.1} parent=39 // pred_fallthru
          _
        // Predicated region
        $region45: #{tpu_custom_call.1} parent=39 // pred_check
          %p347 = pneg %p76
        $region46: #{tpu_custom_call.1} parent=39 // pred_check_branch
          %349 = sbr.rel (%p347) target = $region48
        $region47: #{tpu_custom_call.1} parent=39 // pred_region
          %350 = dma.done [#allocation6], 2048
        $region48: #{tpu_custom_call.1} parent=39 // pred_fallthru
          _
        // Predicated region
        $region49: #{tpu_custom_call.1} parent=39 // pred_check
          %p351 = pneg %p97
        $region50: #{tpu_custom_call.1} parent=39 // pred_check_branch
          %353 = sbr.rel (%p351) target = $region52
        $region51: #{tpu_custom_call.1} parent=39 // pred_region
          %354 = dma.done [#allocation6], 32
        $region52: #{tpu_custom_call.1} parent=39 // pred_fallthru
          _
        // Predicated region
        $region53: #{tpu_custom_call.1} parent=39 // pred_check
          %p355 = pneg %p118
        $region54: #{tpu_custom_call.1} parent=39 // pred_check_branch
          %357 = sbr.rel (%p355) target = $region56
        $region55: #{tpu_custom_call.1} parent=39 // pred_region
          %358 = dma.done [#allocation9], 1024
        $region56: #{tpu_custom_call.1} parent=39 // pred_fallthru
          _
        // Predicated region
        $region57: #{tpu_custom_call.1} parent=39 // pred_check
          %p359 = pneg %p139
        $region58: #{tpu_custom_call.1} parent=39 // pred_check_branch
          %361 = sbr.rel (%p359) target = $region60
        $region59: #{tpu_custom_call.1} parent=39 // pred_region
          %362 = dma.done [#allocation9], 16
        $region60: #{tpu_custom_call.1} parent=39 // pred_fallthru
          _
        %s363 = sand.u32 %s42, 1
        %s364 = scalar_lea.sflag [#allocation3], %s363
        %s365 = sand.u32 %s42, 1
        %s366 = smul.addr %s365, 512
        %s367 = scalar_lea.vmem [#allocation2], %s366
        %p368 = pneg %p55
        %p369 = pneg %p52
        %p370 = pneg %p76
        %p371 = pneg %p73
        %p372 = pneg %p97
        %p373 = pneg %p94
        %p374 = pneg %p118
        %p375 = pneg %p115
        %p376 = pneg %p139
        %p377 = pneg %p136
        %p378 = pneg %p165
        %p379 = pneg %p162
        %s380 = sand.u32 %s152, 1
        %s381 = scalar_lea.sflag [#allocation4], %s380
        %s382 = sand.u32 %s152, 1
        %s383 = smul.addr %s382, 1024
        %s384 = scalar_lea.vmem [#allocation11], %s383
        %p385 = pneg %p191
        %p386 = pneg %p188
        %s387 = sand.u32 %s34, 1
        %s388 = scalar_lea.sflag [#allocation13], %s387
        %s389 = sand.u32 %s178, 1
        %s390 = smul.addr %s389, 512
        %s391 = scalar_lea.vmem [#allocation12], %s390
        %p392 = pneg %p217
        %p393 = pneg %p214
        %s394 = sand.u32 %s34, 1
        %s395 = scalar_lea.sflag [#allocation13], %s394
        %s396 = sand.u32 %s204, 1
        %s397 = smul.addr %s396, 4
        %s398 = scalar_lea.vmem [#allocation14], %s397
        %p399 = pneg %p243
        %p400 = pneg %p240
        %s401 = sand.u32 %s230, 1
        %s402 = scalar_lea.sflag [#allocation16], %s401
        %s403 = sand.u32 %s230, 1
        %s404 = smul.addr %s403, 2
        %s405 = scalar_lea.vmem [#allocation15], %s404
        %s406 = smul.u32 64, %s34
        %s407 = smul.u32 64, %s34
        %s408 = smul.u32 64, %s34
        %v410 = vld [vmem:[%s342] sm:$0xff]
        %v411 = vld [vmem:[%s342 + $0x8] sm:$0xff]
        %v412 = vld [vmem:[%s342 + $0x10] sm:$0xff]
        %v413 = vld [vmem:[%s342 + $0x18] sm:$0xff]
        %v414 = vld [vmem:[%s342 + $0x20] sm:$0xff]
        %v415 = vld [vmem:[%s342 + $0x28] sm:$0xff]
        %v416 = vld [vmem:[%s342 + $0x30] sm:$0xff]
        %v417 = vld [vmem:[%s342 + $0x38] sm:$0xff]
        %v418 = vld [vmem:[%s342 + $0x40] sm:$0xff]
        %v419 = vld [vmem:[%s342 + $0x48] sm:$0xff]
        %v420 = vld [vmem:[%s342 + $0x50] sm:$0xff]
        %v421 = vld [vmem:[%s342 + $0x58] sm:$0xff]
        %v422 = vld [vmem:[%s342 + $0x60] sm:$0xff]
        %v423 = vld [vmem:[%s342 + $0x68] sm:$0xff]
        %v424 = vld [vmem:[%s342 + $0x70] sm:$0xff]
        %v425 = vld [vmem:[%s342 + $0x78] sm:$0xff]
        %v426 = vld [vmem:[%s342 + $0x80] sm:$0xff]
        %v427 = vld [vmem:[%s342 + $0x88] sm:$0xff]
        %v428 = vld [vmem:[%s342 + $0x90] sm:$0xff]
        %v429 = vld [vmem:[%s342 + $0x98] sm:$0xff]
        %v430 = vld [vmem:[%s342 + $0xa0] sm:$0xff]
        %v431 = vld [vmem:[%s342 + $0xa8] sm:$0xff]
        %v432 = vld [vmem:[%s342 + $0xb0] sm:$0xff]
        %v433 = vld [vmem:[%s342 + $0xb8] sm:$0xff]
        %v434 = vld [vmem:[%s342 + $0xc0] sm:$0xff]
        %v435 = vld [vmem:[%s342 + $0xc8] sm:$0xff]
        %v436 = vld [vmem:[%s342 + $0xd0] sm:$0xff]
        %v437 = vld [vmem:[%s342 + $0xd8] sm:$0xff]
        %v438 = vld [vmem:[%s342 + $0xe0] sm:$0xff]
        %v439 = vld [vmem:[%s342 + $0xe8] sm:$0xff]
        %v440 = vld [vmem:[%s342 + $0xf0] sm:$0xff]
        %v441 = vld [vmem:[%s342 + $0xf8] sm:$0xff]
        %v442 = vld [vmem:[%s342 + $0x100] sm:$0xff]
        %v443 = vld [vmem:[%s342 + $0x108] sm:$0xff]
        %v444 = vld [vmem:[%s342 + $0x110] sm:$0xff]
        %v445 = vld [vmem:[%s342 + $0x118] sm:$0xff]
        %v446 = vld [vmem:[%s342 + $0x120] sm:$0xff]
        %v447 = vld [vmem:[%s342 + $0x128] sm:$0xff]
        %v448 = vld [vmem:[%s342 + $0x130] sm:$0xff]
        %v449 = vld [vmem:[%s342 + $0x138] sm:$0xff]
        %v450 = vld [vmem:[%s342 + $0x140] sm:$0xff]
        %v451 = vld [vmem:[%s342 + $0x148] sm:$0xff]
        %v452 = vld [vmem:[%s342 + $0x150] sm:$0xff]
        %v453 = vld [vmem:[%s342 + $0x158] sm:$0xff]
        %v454 = vld [vmem:[%s342 + $0x160] sm:$0xff]
        %v455 = vld [vmem:[%s342 + $0x168] sm:$0xff]
        %v456 = vld [vmem:[%s342 + $0x170] sm:$0xff]
        %v457 = vld [vmem:[%s342 + $0x178] sm:$0xff]
        %v458 = vld [vmem:[%s342 + $0x180] sm:$0xff]
        %v459 = vld [vmem:[%s342 + $0x188] sm:$0xff]
        %v460 = vld [vmem:[%s342 + $0x190] sm:$0xff]
        %v461 = vld [vmem:[%s342 + $0x198] sm:$0xff]
        %v462 = vld [vmem:[%s342 + $0x1a0] sm:$0xff]
        %v463 = vld [vmem:[%s342 + $0x1a8] sm:$0xff]
        %v464 = vld [vmem:[%s342 + $0x1b0] sm:$0xff]
        %v465 = vld [vmem:[%s342 + $0x1b8] sm:$0xff]
        %v466 = vld [vmem:[%s342 + $0x1c0] sm:$0xff]
        %v467 = vld [vmem:[%s342 + $0x1c8] sm:$0xff]
        %v468 = vld [vmem:[%s342 + $0x1d0] sm:$0xff]
        %v469 = vld [vmem:[%s342 + $0x1d8] sm:$0xff]
        %v470 = vld [vmem:[%s342 + $0x1e0] sm:$0xff]
        %v471 = vld [vmem:[%s342 + $0x1e8] sm:$0xff]
        %v472 = vld [vmem:[%s342 + $0x1f0] sm:$0xff]
        %v473 = vld [vmem:[%s342 + $0x1f8] sm:$0xff]
        %v474 = vmax.f32 %v410, 0.0
        %v475 = vmax.f32 %v411, 0.0
        %v476 = vmax.f32 %v412, 0.0
        %v477 = vmax.f32 %v413, 0.0
        %v478 = vmax.f32 %v414, 0.0
        %v479 = vmax.f32 %v415, 0.0
        %v480 = vmax.f32 %v416, 0.0
        %v481 = vmax.f32 %v417, 0.0
        %v482 = vmax.f32 %v418, 0.0
        %v483 = vmax.f32 %v419, 0.0
        %v484 = vmax.f32 %v420, 0.0
        %v485 = vmax.f32 %v421, 0.0
        %v486 = vmax.f32 %v422, 0.0
        %v487 = vmax.f32 %v423, 0.0
        %v488 = vmax.f32 %v424, 0.0
        %v489 = vmax.f32 %v425, 0.0
        %v490 = vmax.f32 %v426, 0.0
        %v491 = vmax.f32 %v427, 0.0
        %v492 = vmax.f32 %v428, 0.0
        %v493 = vmax.f32 %v429, 0.0
        %v494 = vmax.f32 %v430, 0.0
        %v495 = vmax.f32 %v431, 0.0
        %v496 = vmax.f32 %v432, 0.0
        %v497 = vmax.f32 %v433, 0.0
        %v498 = vmax.f32 %v434, 0.0
        %v499 = vmax.f32 %v435, 0.0
        %v500 = vmax.f32 %v436, 0.0
        %v501 = vmax.f32 %v437, 0.0
        %v502 = vmax.f32 %v438, 0.0
        %v503 = vmax.f32 %v439, 0.0
        %v504 = vmax.f32 %v440, 0.0
        %v505 = vmax.f32 %v441, 0.0
        %v506 = vmax.f32 %v442, 0.0
        %v507 = vmax.f32 %v443, 0.0
        %v508 = vmax.f32 %v444, 0.0
        %v509 = vmax.f32 %v445, 0.0
        %v510 = vmax.f32 %v446, 0.0
        %v511 = vmax.f32 %v447, 0.0
        %v512 = vmax.f32 %v448, 0.0
        %v513 = vmax.f32 %v449, 0.0
        %v514 = vmax.f32 %v450, 0.0
        %v515 = vmax.f32 %v451, 0.0
        %v516 = vmax.f32 %v452, 0.0
        %v517 = vmax.f32 %v453, 0.0
        %v518 = vmax.f32 %v454, 0.0
        %v519 = vmax.f32 %v455, 0.0
        %v520 = vmax.f32 %v456, 0.0
        %v521 = vmax.f32 %v457, 0.0
        %v522 = vmax.f32 %v458, 0.0
        %v523 = vmax.f32 %v459, 0.0
        %v524 = vmax.f32 %v460, 0.0
        %v525 = vmax.f32 %v461, 0.0
        %v526 = vmax.f32 %v462, 0.0
        %v527 = vmax.f32 %v463, 0.0
        %v528 = vmax.f32 %v464, 0.0
        %v529 = vmax.f32 %v465, 0.0
        %v530 = vmax.f32 %v466, 0.0
        %v531 = vmax.f32 %v467, 0.0
        %v532 = vmax.f32 %v468, 0.0
        %v533 = vmax.f32 %v469, 0.0
        %v534 = vmax.f32 %v470, 0.0
        %v535 = vmax.f32 %v471, 0.0
        %v536 = vmax.f32 %v472, 0.0
        %v537 = vmax.f32 %v473, 0.0
        %v538 = vpack.c.bf16 %v475, %v474
        %v539 = vpack.c.bf16 %v477, %v476
        %v540 = vpack.c.bf16 %v479, %v478
        %v541 = vpack.c.bf16 %v481, %v480
        %v542 = vpack.c.bf16 %v483, %v482
        %v543 = vpack.c.bf16 %v485, %v484
        %v544 = vpack.c.bf16 %v487, %v486
        %v545 = vpack.c.bf16 %v489, %v488
        %v546 = vpack.c.bf16 %v491, %v490
        %v547 = vpack.c.bf16 %v493, %v492
        %v548 = vpack.c.bf16 %v495, %v494
        %v549 = vpack.c.bf16 %v497, %v496
        %v550 = vpack.c.bf16 %v499, %v498
        %v551 = vpack.c.bf16 %v501, %v500
        %v552 = vpack.c.bf16 %v503, %v502
        %v553 = vpack.c.bf16 %v505, %v504
        %v554 = vpack.c.bf16 %v507, %v506
        %v555 = vpack.c.bf16 %v509, %v508
        %v556 = vpack.c.bf16 %v511, %v510
        %v557 = vpack.c.bf16 %v513, %v512
        %v558 = vpack.c.bf16 %v515, %v514
        %v559 = vpack.c.bf16 %v517, %v516
        %v560 = vpack.c.bf16 %v519, %v518
        %v561 = vpack.c.bf16 %v521, %v520
        %v562 = vpack.c.bf16 %v523, %v522
        %v563 = vpack.c.bf16 %v525, %v524
        %v564 = vpack.c.bf16 %v527, %v526
        %v565 = vpack.c.bf16 %v529, %v528
        %v566 = vpack.c.bf16 %v531, %v530
        %v567 = vpack.c.bf16 %v533, %v532
        %v568 = vpack.c.bf16 %v535, %v534
        %v569 = vpack.c.bf16 %v537, %v536
        %v570 = vld [vmem:[#allocation5] sm:$0xff]
        %v571 = vld [vmem:[#allocation5 + $0x8] sm:$0xff]
        %v572 = vld [vmem:[#allocation5 + $0x10] sm:$0xff]
        %v573 = vld [vmem:[#allocation5 + $0x18] sm:$0xff]
        %v574 = vld [vmem:[#allocation5 + $0x20] sm:$0xff]
        %v575 = vld [vmem:[#allocation5 + $0x28] sm:$0xff]
        %v576 = vld [vmem:[#allocation5 + $0x30] sm:$0xff]
        %v577 = vld [vmem:[#allocation5 + $0x38] sm:$0xff]
        %v578 = vld [vmem:[#allocation5 + $0x40] sm:$0xff]
        %v579 = vld [vmem:[#allocation5 + $0x48] sm:$0xff]
        %v580 = vld [vmem:[#allocation5 + $0x50] sm:$0xff]
        %v581 = vld [vmem:[#allocation5 + $0x58] sm:$0xff]
        %v582 = vld [vmem:[#allocation5 + $0x60] sm:$0xff]
        %v583 = vld [vmem:[#allocation5 + $0x68] sm:$0xff]
        %v584 = vld [vmem:[#allocation5 + $0x70] sm:$0xff]
        %v585 = vld [vmem:[#allocation5 + $0x78] sm:$0xff]
        %v586 = vld [vmem:[#allocation7] sm:$0x3]
        %v588 = vlaneseq
        %v589 = vshrl.u32 %v588, 7
        %v590 = vsub.s32 0, %v589
        %v591 = vrot.slane %v586, %v590
        %v592 = vlaneseq
        %v593 = vshrl.u32 %v592, 7
        %v594 = vsub.s32 1, %v593
        %v595 = vrot.slane %v586, %v594
        %v614 = vunpack.c.l.b16 %v570
        %v615 = vunpack.c.h.b16 %v570
        %v616 = vunpack.c.l.b16 %v571
        %v617 = vunpack.c.h.b16 %v571
        %v618 = vunpack.c.l.b16 %v572
        %v619 = vunpack.c.h.b16 %v572
        %v620 = vunpack.c.l.b16 %v573
        %v621 = vunpack.c.h.b16 %v573
        %v622 = vunpack.c.l.b16 %v574
        %v623 = vunpack.c.h.b16 %v574
        %v624 = vunpack.c.l.b16 %v575
        %v625 = vunpack.c.h.b16 %v575
        %v626 = vunpack.c.l.b16 %v576
        %v627 = vunpack.c.h.b16 %v576
        %v628 = vunpack.c.l.b16 %v577
        %v629 = vunpack.c.h.b16 %v577
        %v630 = vunpack.c.l.b16 %v578
        %v631 = vunpack.c.h.b16 %v578
        %v632 = vunpack.c.l.b16 %v579
        %v633 = vunpack.c.h.b16 %v579
        %v634 = vunpack.c.l.b16 %v580
        %v635 = vunpack.c.h.b16 %v580
        %v636 = vunpack.c.l.b16 %v581
        %v637 = vunpack.c.h.b16 %v581
        %v638 = vunpack.c.l.b16 %v582
        %v639 = vunpack.c.h.b16 %v582
        %v640 = vunpack.c.l.b16 %v583
        %v641 = vunpack.c.h.b16 %v583
        %v642 = vunpack.c.l.b16 %v584
        %v643 = vunpack.c.h.b16 %v584
        %v644 = vunpack.c.l.b16 %v585
        %v645 = vunpack.c.h.b16 %v585
        %v646 = vpack.c.b16 %v616, %v614
        %v647 = vpack.c.b16 %v617, %v615
        %v648 = vpack.c.b16 %v620, %v618
        %v649 = vpack.c.b16 %v621, %v619
        %v650 = vpack.c.b16 %v624, %v622
        %v651 = vpack.c.b16 %v625, %v623
        %v652 = vpack.c.b16 %v628, %v626
        %v653 = vpack.c.b16 %v629, %v627
        %v654 = vpack.c.b16 %v632, %v630
        %v655 = vpack.c.b16 %v633, %v631
        %v656 = vpack.c.b16 %v636, %v634
        %v657 = vpack.c.b16 %v637, %v635
        %v658 = vpack.c.b16 %v640, %v638
        %v659 = vpack.c.b16 %v641, %v639
        %v660 = vpack.c.b16 %v644, %v642
        %v661 = vpack.c.b16 %v645, %v643
        %678 = vmatprep.subr.bf16.mxu0 %v647
        %679 = vmatpush1.bf16.msra.mxu0 %v646
        %680 = vmatprep.subr.bf16.mxu0 %v649
        %681 = vmatpush1.bf16.msra.mxu0 %v648
        %682 = vmatprep.subr.bf16.mxu0 %v651
        %683 = vmatpush1.bf16.msra.mxu0 %v650
        %684 = vmatprep.subr.bf16.mxu0 %v653
        %685 = vmatpush1.bf16.msra.mxu0 %v652
        %686 = vmatprep.subr.bf16.mxu0 %v655
        %687 = vmatpush1.bf16.msra.mxu0 %v654
        %688 = vmatprep.subr.bf16.mxu0 %v657
        %689 = vmatpush1.bf16.msra.mxu0 %v656
        %690 = vmatprep.subr.bf16.mxu0 %v659
        %691 = vmatpush1.bf16.msra.mxu0 %v658
        %692 = vmatprep.subr.bf16.mxu0 %v661
        %693 = vmatpush1.bf16.msra.mxu0 %v660
        %694 = vmatprep.subr.bf16.mxu0 0
        %695 = vmatpush1.bf16.msra.mxu0 0
        %696 = vmatprep.subr.bf16.mxu0 0
        %697 = vmatpush1.bf16.msra.mxu0 0
        %698 = vmatprep.subr.bf16.mxu0 0
        %699 = vmatpush1.bf16.msra.mxu0 0
        %700 = vmatprep.subr.bf16.mxu0 0
        %701 = vmatpush1.bf16.msra.mxu0 0
        %702 = vmatprep.subr.bf16.mxu0 0
        %703 = vmatpush1.bf16.msra.mxu0 0
        %704 = vmatprep.subr.bf16.mxu0 0
        %705 = vmatpush1.bf16.msra.mxu0 0
        %706 = vmatprep.subr.bf16.mxu0 0
        %707 = vmatpush1.bf16.msra.mxu0 0
        %708 = vmatprep.subr.bf16.mxu0 0
        %709 = vmatpush1.bf16.msra.mxu0 0
        %710 = vmatprep.mubr.bf16.mxu0 0
        %711 = vmatmul.mubr.bf16.gmra.mrb[0].mxu0 %v538
        %v712 = vpop.f32.mrb[0].mxu0
        %v713 = vadd.f32 %v591, %v712
        %v714 = vpop.f32.mrb[0].mxu0
        %v715 = vadd.f32 %v595, %v714
        %v716 = vpop.f32.mrb[0].mxu0
        %v717 = vadd.f32 %v591, %v716
        %v718 = vpop.f32.mrb[0].mxu0
        %v719 = vadd.f32 %v595, %v718
        %720 = vmatprep.mubr.bf16.mxu0 0
        %721 = vmatmul.mubr.bf16.gmra.mrb[0].mxu0 %v539
        %v722 = vpop.f32.mrb[0].mxu0
        %v723 = vadd.f32 %v591, %v722
        %v724 = vpop.f32.mrb[0].mxu0
        %v725 = vadd.f32 %v595, %v724
        %v726 = vpop.f32.mrb[0].mxu0
        %v727 = vadd.f32 %v591, %v726
        %v728 = vpop.f32.mrb[0].mxu0
        %v729 = vadd.f32 %v595, %v728
        %730 = vmatprep.mubr.bf16.mxu0 0
        %731 = vmatmul.mubr.bf16.gmra.mrb[0].mxu0 %v540
        %v732 = vpop.f32.mrb[0].mxu0
        %v733 = vadd.f32 %v591, %v732
        %v734 = vpop.f32.mrb[0].mxu0
        %v735 = vadd.f32 %v595, %v734
        %v736 = vpop.f32.mrb[0].mxu0
        %v737 = vadd.f32 %v591, %v736
        %v738 = vpop.f32.mrb[0].mxu0
        %v739 = vadd.f32 %v595, %v738
        %740 = vmatprep.mubr.bf16.mxu0 0
        %741 = vmatmul.mubr.bf16.gmra.mrb[0].mxu0 %v541
        %v742 = vpop.f32.mrb[0].mxu0
        %v743 = vadd.f32 %v591, %v742
        %v744 = vpop.f32.mrb[0].mxu0
        %v745 = vadd.f32 %v595, %v744
        %v746 = vpop.f32.mrb[0].mxu0
        %v747 = vadd.f32 %v591, %v746
        %v748 = vpop.f32.mrb[0].mxu0
        %v749 = vadd.f32 %v595, %v748
        %750 = vmatprep.mubr.bf16.mxu0 0
        %751 = vmatmul.mubr.bf16.gmra.mrb[0].mxu0 %v542
        %v752 = vpop.f32.mrb[0].mxu0
        %v753 = vadd.f32 %v591, %v752
        %v754 = vpop.f32.mrb[0].mxu0
        %v755 = vadd.f32 %v595, %v754
        %v756 = vpop.f32.mrb[0].mxu0
        %v757 = vadd.f32 %v591, %v756
        %v758 = vpop.f32.mrb[0].mxu0
        %v759 = vadd.f32 %v595, %v758
        %760 = vmatprep.mubr.bf16.mxu0 0
        %761 = vmatmul.mubr.bf16.gmra.mrb[0].mxu0 %v543
        %v762 = vpop.f32.mrb[0].mxu0
        %v763 = vadd.f32 %v591, %v762
        %v764 = vpop.f32.mrb[0].mxu0
        %v765 = vadd.f32 %v595, %v764
        %v766 = vpop.f32.mrb[0].mxu0
        %v767 = vadd.f32 %v591, %v766
        %v768 = vpop.f32.mrb[0].mxu0
        %v769 = vadd.f32 %v595, %v768
        %770 = vmatprep.mubr.bf16.mxu0 0
        %771 = vmatmul.mubr.bf16.gmra.mrb[0].mxu0 %v544
        %v772 = vpop.f32.mrb[0].mxu0
        %v773 = vadd.f32 %v591, %v772
        %v774 = vpop.f32.mrb[0].mxu0
        %v775 = vadd.f32 %v595, %v774
        %v776 = vpop.f32.mrb[0].mxu0
        %v777 = vadd.f32 %v591, %v776
        %v778 = vpop.f32.mrb[0].mxu0
        %v779 = vadd.f32 %v595, %v778
        %780 = vmatprep.mubr.bf16.mxu0 0
        %781 = vmatmul.mubr.bf16.gmra.mrb[0].mxu0 %v545
        %v782 = vpop.f32.mrb[0].mxu0
        %v783 = vadd.f32 %v591, %v782
        %v784 = vpop.f32.mrb[0].mxu0
        %v785 = vadd.f32 %v595, %v784
        %v786 = vpop.f32.mrb[0].mxu0
        %v787 = vadd.f32 %v591, %v786
        %v788 = vpop.f32.mrb[0].mxu0
        %v789 = vadd.f32 %v595, %v788
        %790 = vmatprep.mubr.bf16.mxu0 0
        %791 = vmatmul.mubr.bf16.gmra.mrb[0].mxu0 %v546
        %v792 = vpop.f32.mrb[0].mxu0
        %v793 = vadd.f32 %v591, %v792
        %v794 = vpop.f32.mrb[0].mxu0
        %v795 = vadd.f32 %v595, %v794
        %v796 = vpop.f32.mrb[0].mxu0
        %v797 = vadd.f32 %v591, %v796
        %v798 = vpop.f32.mrb[0].mxu0
        %v799 = vadd.f32 %v595, %v798
        %800 = vmatprep.mubr.bf16.mxu0 0
        %801 = vmatmul.mubr.bf16.gmra.mrb[0].mxu0 %v547
        %v802 = vpop.f32.mrb[0].mxu0
        %v803 = vadd.f32 %v591, %v802
        %v804 = vpop.f32.mrb[0].mxu0
        %v805 = vadd.f32 %v595, %v804
        %v806 = vpop.f32.mrb[0].mxu0
        %v807 = vadd.f32 %v591, %v806
        %v808 = vpop.f32.mrb[0].mxu0
        %v809 = vadd.f32 %v595, %v808
        %810 = vmatprep.mubr.bf16.mxu0 0
        %811 = vmatmul.mubr.bf16.gmra.mrb[0].mxu0 %v548
        %v812 = vpop.f32.mrb[0].mxu0
        %v813 = vadd.f32 %v591, %v812
        %v814 = vpop.f32.mrb[0].mxu0
        %v815 = vadd.f32 %v595, %v814
        %v816 = vpop.f32.mrb[0].mxu0
        %v817 = vadd.f32 %v591, %v816
        %v818 = vpop.f32.mrb[0].mxu0
        %v819 = vadd.f32 %v595, %v818
        %820 = vmatprep.mubr.bf16.mxu0 0
        %821 = vmatmul.mubr.bf16.gmra.mrb[0].mxu0 %v549
        %v822 = vpop.f32.mrb[0].mxu0
        %v823 = vadd.f32 %v591, %v822
        %v824 = vpop.f32.mrb[0].mxu0
        %v825 = vadd.f32 %v595, %v824
        %v826 = vpop.f32.mrb[0].mxu0
        %v827 = vadd.f32 %v591, %v826
        %v828 = vpop.f32.mrb[0].mxu0
        %v829 = vadd.f32 %v595, %v828
        %830 = vmatprep.mubr.bf16.mxu0 0
        %831 = vmatmul.mubr.bf16.gmra.mrb[0].mxu0 %v550
        %v832 = vpop.f32.mrb[0].mxu0
        %v833 = vadd.f32 %v591, %v832
        %v834 = vpop.f32.mrb[0].mxu0
        %v835 = vadd.f32 %v595, %v834
        %v836 = vpop.f32.mrb[0].mxu0
        %v837 = vadd.f32 %v591, %v836
        %v838 = vpop.f32.mrb[0].mxu0
        %v839 = vadd.f32 %v595, %v838
        %840 = vmatprep.mubr.bf16.mxu0 0
        %841 = vmatmul.mubr.bf16.gmra.mrb[0].mxu0 %v551
        %v842 = vpop.f32.mrb[0].mxu0
        %v843 = vadd.f32 %v591, %v842
        %v844 = vpop.f32.mrb[0].mxu0
        %v845 = vadd.f32 %v595, %v844
        %v846 = vpop.f32.mrb[0].mxu0
        %v847 = vadd.f32 %v591, %v846
        %v848 = vpop.f32.mrb[0].mxu0
        %v849 = vadd.f32 %v595, %v848
        %850 = vmatprep.mubr.bf16.mxu0 0
        %851 = vmatmul.mubr.bf16.gmra.mrb[0].mxu0 %v552
        %v852 = vpop.f32.mrb[0].mxu0
        %v853 = vadd.f32 %v591, %v852
        %v854 = vpop.f32.mrb[0].mxu0
        %v855 = vadd.f32 %v595, %v854
        %v856 = vpop.f32.mrb[0].mxu0
        %v857 = vadd.f32 %v591, %v856
        %v858 = vpop.f32.mrb[0].mxu0
        %v859 = vadd.f32 %v595, %v858
        %860 = vmatprep.mubr.bf16.mxu0 0
        %861 = vmatmul.mubr.bf16.gmra.mrb[0].mxu0 %v553
        %v862 = vpop.f32.mrb[0].mxu0
        %v863 = vadd.f32 %v591, %v862
        %v864 = vpop.f32.mrb[0].mxu0
        %v865 = vadd.f32 %v595, %v864
        %v866 = vpop.f32.mrb[0].mxu0
        %v867 = vadd.f32 %v591, %v866
        %v868 = vpop.f32.mrb[0].mxu0
        %v869 = vadd.f32 %v595, %v868
        %870 = vmatprep.mubr.bf16.mxu0 0
        %871 = vmatmul.mubr.bf16.gmra.mrb[0].mxu0 %v554
        %v872 = vpop.f32.mrb[0].mxu0
        %v873 = vadd.f32 %v591, %v872
        %v874 = vpop.f32.mrb[0].mxu0
        %v875 = vadd.f32 %v595, %v874
        %v876 = vpop.f32.mrb[0].mxu0
        %v877 = vadd.f32 %v591, %v876
        %v878 = vpop.f32.mrb[0].mxu0
        %v879 = vadd.f32 %v595, %v878
        %880 = vmatprep.mubr.bf16.mxu0 0
        %881 = vmatmul.mubr.bf16.gmra.mrb[0].mxu0 %v555
        %v882 = vpop.f32.mrb[0].mxu0
        %v883 = vadd.f32 %v591, %v882
        %v884 = vpop.f32.mrb[0].mxu0
        %v885 = vadd.f32 %v595, %v884
        %v886 = vpop.f32.mrb[0].mxu0
        %v887 = vadd.f32 %v591, %v886
        %v888 = vpop.f32.mrb[0].mxu0
        %v889 = vadd.f32 %v595, %v888
        %890 = vmatprep.mubr.bf16.mxu0 0
        %891 = vmatmul.mubr.bf16.gmra.mrb[0].mxu0 %v556
        %v892 = vpop.f32.mrb[0].mxu0
        %v893 = vadd.f32 %v591, %v892
        %v894 = vpop.f32.mrb[0].mxu0
        %v895 = vadd.f32 %v595, %v894
        %v896 = vpop.f32.mrb[0].mxu0
        %v897 = vadd.f32 %v591, %v896
        %v898 = vpop.f32.mrb[0].mxu0
        %v899 = vadd.f32 %v595, %v898
        %900 = vmatprep.mubr.bf16.mxu0 0
        %901 = vmatmul.mubr.bf16.gmra.mrb[0].mxu0 %v557
        %v902 = vpop.f32.mrb[0].mxu0
        %v903 = vadd.f32 %v591, %v902
        %v904 = vpop.f32.mrb[0].mxu0
        %v905 = vadd.f32 %v595, %v904
        %v906 = vpop.f32.mrb[0].mxu0
        %v907 = vadd.f32 %v591, %v906
        %v908 = vpop.f32.mrb[0].mxu0
        %v909 = vadd.f32 %v595, %v908
        %910 = vmatprep.mubr.bf16.mxu0 0
        %911 = vmatmul.mubr.bf16.gmra.mrb[0].mxu0 %v558
        %v912 = vpop.f32.mrb[0].mxu0
        %v913 = vadd.f32 %v591, %v912
        %v914 = vpop.f32.mrb[0].mxu0
        %v915 = vadd.f32 %v595, %v914
        %v916 = vpop.f32.mrb[0].mxu0
        %v917 = vadd.f32 %v591, %v916
        %v918 = vpop.f32.mrb[0].mxu0
        %v919 = vadd.f32 %v595, %v918
        %920 = vmatprep.mubr.bf16.mxu0 0
        %921 = vmatmul.mubr.bf16.gmra.mrb[0].mxu0 %v559
        %v922 = vpop.f32.mrb[0].mxu0
        %v923 = vadd.f32 %v591, %v922
        %v924 = vpop.f32.mrb[0].mxu0
        %v925 = vadd.f32 %v595, %v924
        %v926 = vpop.f32.mrb[0].mxu0
        %v927 = vadd.f32 %v591, %v926
        %v928 = vpop.f32.mrb[0].mxu0
        %v929 = vadd.f32 %v595, %v928
        %930 = vmatprep.mubr.bf16.mxu0 0
        %931 = vmatmul.mubr.bf16.gmra.mrb[0].mxu0 %v560
        %v932 = vpop.f32.mrb[0].mxu0
        %v933 = vadd.f32 %v591, %v932
        %v934 = vpop.f32.mrb[0].mxu0
        %v935 = vadd.f32 %v595, %v934
        %v936 = vpop.f32.mrb[0].mxu0
        %v937 = vadd.f32 %v591, %v936
        %v938 = vpop.f32.mrb[0].mxu0
        %v939 = vadd.f32 %v595, %v938
        %940 = vmatprep.mubr.bf16.mxu0 0
        %941 = vmatmul.mubr.bf16.gmra.mrb[0].mxu0 %v561
        %v942 = vpop.f32.mrb[0].mxu0
        %v943 = vadd.f32 %v591, %v942
        %v944 = vpop.f32.mrb[0].mxu0
        %v945 = vadd.f32 %v595, %v944
        %v946 = vpop.f32.mrb[0].mxu0
        %v947 = vadd.f32 %v591, %v946
        %v948 = vpop.f32.mrb[0].mxu0
        %v949 = vadd.f32 %v595, %v948
        %950 = vmatprep.mubr.bf16.mxu0 0
        %951 = vmatmul.mubr.bf16.gmra.mrb[0].mxu0 %v562
        %v952 = vpop.f32.mrb[0].mxu0
        %v953 = vadd.f32 %v591, %v952
        %v954 = vpop.f32.mrb[0].mxu0
        %v955 = vadd.f32 %v595, %v954
        %v956 = vpop.f32.mrb[0].mxu0
        %v957 = vadd.f32 %v591, %v956
        %v958 = vpop.f32.mrb[0].mxu0
        %v959 = vadd.f32 %v595, %v958
        %960 = vmatprep.mubr.bf16.mxu0 0
        %961 = vmatmul.mubr.bf16.gmra.mrb[0].mxu0 %v563
        %v962 = vpop.f32.mrb[0].mxu0
        %v963 = vadd.f32 %v591, %v962
        %v964 = vpop.f32.mrb[0].mxu0
        %v965 = vadd.f32 %v595, %v964
        %v966 = vpop.f32.mrb[0].mxu0
        %v967 = vadd.f32 %v591, %v966
        %v968 = vpop.f32.mrb[0].mxu0
        %v969 = vadd.f32 %v595, %v968
        %970 = vmatprep.mubr.bf16.mxu0 0
        %971 = vmatmul.mubr.bf16.gmra.mrb[0].mxu0 %v564
        %v972 = vpop.f32.mrb[0].mxu0
        %v973 = vadd.f32 %v591, %v972
        %v974 = vpop.f32.mrb[0].mxu0
        %v975 = vadd.f32 %v595, %v974
        %v976 = vpop.f32.mrb[0].mxu0
        %v977 = vadd.f32 %v591, %v976
        %v978 = vpop.f32.mrb[0].mxu0
        %v979 = vadd.f32 %v595, %v978
        %980 = vmatprep.mubr.bf16.mxu0 0
        %981 = vmatmul.mubr.bf16.gmra.mrb[0].mxu0 %v565
        %v982 = vpop.f32.mrb[0].mxu0
        %v983 = vadd.f32 %v591, %v982
        %v984 = vpop.f32.mrb[0].mxu0
        %v985 = vadd.f32 %v595, %v984
        %v986 = vpop.f32.mrb[0].mxu0
        %v987 = vadd.f32 %v591, %v986
        %v988 = vpop.f32.mrb[0].mxu0
        %v989 = vadd.f32 %v595, %v988
        %990 = vmatprep.mubr.bf16.mxu0 0
        %991 = vmatmul.mubr.bf16.gmra.mrb[0].mxu0 %v566
        %v992 = vpop.f32.mrb[0].mxu0
        %v993 = vadd.f32 %v591, %v992
        %v994 = vpop.f32.mrb[0].mxu0
        %v995 = vadd.f32 %v595, %v994
        %v996 = vpop.f32.mrb[0].mxu0
        %v997 = vadd.f32 %v591, %v996
        %v998 = vpop.f32.mrb[0].mxu0
        %v999 = vadd.f32 %v595, %v998
        %1000 = vmatprep.mubr.bf16.mxu0 0
        %1001 = vmatmul.mubr.bf16.gmra.mrb[0].mxu0 %v567
        %v1002 = vpop.f32.mrb[0].mxu0
        %v1003 = vadd.f32 %v591, %v1002
        %v1004 = vpop.f32.mrb[0].mxu0
        %v1005 = vadd.f32 %v595, %v1004
        %v1006 = vpop.f32.mrb[0].mxu0
        %v1007 = vadd.f32 %v591, %v1006
        %v1008 = vpop.f32.mrb[0].mxu0
        %v1009 = vadd.f32 %v595, %v1008
        %1010 = vmatprep.mubr.bf16.mxu0 0
        %1011 = vmatmul.mubr.bf16.gmra.mrb[0].mxu0 %v568
        %v1012 = vpop.f32.mrb[0].mxu0
        %v1013 = vadd.f32 %v591, %v1012
        %v1014 = vpop.f32.mrb[0].mxu0
        %v1015 = vadd.f32 %v595, %v1014
        %v1016 = vpop.f32.mrb[0].mxu0
        %v1017 = vadd.f32 %v591, %v1016
        %v1018 = vpop.f32.mrb[0].mxu0
        %v1019 = vadd.f32 %v595, %v1018
        %1020 = vmatprep.mubr.bf16.mxu0 0
        %1021 = vmatmul.mubr.bf16.gmra.mrb[0].mxu0 %v569
        %v1022 = vpop.f32.mrb[0].mxu0
        %v1023 = vadd.f32 %v591, %v1022
        %v1024 = vpop.f32.mrb[0].mxu0
        %v1025 = vadd.f32 %v595, %v1024
        %v1026 = vpop.f32.mrb[0].mxu0
        %v1027 = vadd.f32 %v591, %v1026
        %v1028 = vpop.f32.mrb[0].mxu0
        %v1029 = vadd.f32 %v595, %v1028
        %1030 = vdwg.mxu0
        %v1031 = vld [vmem:[#allocation8] sm:$0xf]
        %v1032 = vld [vmem:[#allocation8 + $0x4] sm:$0xf]
        %v1033 = vld [vmem:[#allocation8 + $0x8] sm:$0xf]
        %v1034 = vld [vmem:[#allocation8 + $0xc] sm:$0xf]
        %v1035 = vld [vmem:[#allocation8 + $0x10] sm:$0xf]
        %v1036 = vld [vmem:[#allocation8 + $0x14] sm:$0xf]
        %v1037 = vld [vmem:[#allocation8 + $0x18] sm:$0xf]
        %v1038 = vld [vmem:[#allocation8 + $0x1c] sm:$0xf]
        %v1039 = vld [vmem:[#allocation8 + $0x20] sm:$0xf]
        %v1040 = vld [vmem:[#allocation8 + $0x24] sm:$0xf]
        %v1041 = vld [vmem:[#allocation8 + $0x28] sm:$0xf]
        %v1042 = vld [vmem:[#allocation8 + $0x2c] sm:$0xf]
        %v1043 = vld [vmem:[#allocation8 + $0x30] sm:$0xf]
        %v1044 = vld [vmem:[#allocation8 + $0x34] sm:$0xf]
        %v1045 = vld [vmem:[#allocation8 + $0x38] sm:$0xf]
        %v1046 = vld [vmem:[#allocation8 + $0x3c] sm:$0xf]
        %v1047 = vld [vmem:[#allocation10] sm:$0x1]
        %v1049 = vlaneseq
        %v1050 = vshrl.u32 %v1049, 7
        %v1051 = vsub.s32 0, %v1050
        %v1052 = vrot.slane %v1047, %v1051
        %v1070 = vunpack.c.l.b16 %v1031
        %v1071 = vunpack.c.l.b16 %v1032
        %v1072 = vunpack.c.l.b16 %v1033
        %v1073 = vunpack.c.l.b16 %v1034
        %v1074 = vunpack.c.l.b16 %v1035
        %v1075 = vunpack.c.l.b16 %v1036
        %v1076 = vunpack.c.l.b16 %v1037
        %v1077 = vunpack.c.l.b16 %v1038
        %v1078 = vunpack.c.l.b16 %v1039
        %v1079 = vunpack.c.l.b16 %v1040
        %v1080 = vunpack.c.l.b16 %v1041
        %v1081 = vunpack.c.l.b16 %v1042
        %v1082 = vunpack.c.l.b16 %v1043
        %v1083 = vunpack.c.l.b16 %v1044
        %v1084 = vunpack.c.l.b16 %v1045
        %v1085 = vunpack.c.l.b16 %v1046
        %v1086 = vpack.c.b16 %v1071, %v1070
        %v1087 = vpack.c.b16 %v1073, %v1072
        %v1088 = vpack.c.b16 %v1075, %v1074
        %v1089 = vpack.c.b16 %v1077, %v1076
        %v1090 = vpack.c.b16 %v1079, %v1078
        %v1091 = vpack.c.b16 %v1081, %v1080
        %v1092 = vpack.c.b16 %v1083, %v1082
        %v1093 = vpack.c.b16 %v1085, %v1084
        %1102 = vmatprep.subr.bf16.mxu0 0
        %1103 = vmatpush1.bf16.msra.mxu0 %v1086
        %1104 = vmatprep.subr.bf16.mxu0 0
        %1105 = vmatpush1.bf16.msra.mxu0 %v1087
        %1106 = vmatprep.subr.bf16.mxu0 0
        %1107 = vmatpush1.bf16.msra.mxu0 %v1088
        %1108 = vmatprep.subr.bf16.mxu0 0
        %1109 = vmatpush1.bf16.msra.mxu0 %v1089
        %1110 = vmatprep.subr.bf16.mxu0 0
        %1111 = vmatpush1.bf16.msra.mxu0 %v1090
        %1112 = vmatprep.subr.bf16.mxu0 0
        %1113 = vmatpush1.bf16.msra.mxu0 %v1091
        %1114 = vmatprep.subr.bf16.mxu0 0
        %1115 = vmatpush1.bf16.msra.mxu0 %v1092
        %1116 = vmatprep.subr.bf16.mxu0 0
        %1117 = vmatpush1.bf16.msra.mxu0 %v1093
        %1118 = vmatprep.subr.bf16.mxu0 0
        %1119 = vmatpush1.bf16.msra.mxu0 0
        %1120 = vmatprep.subr.bf16.mxu0 0
        %1121 = vmatpush1.bf16.msra.mxu0 0
        %1122 = vmatprep.subr.bf16.mxu0 0
        %1123 = vmatpush1.bf16.msra.mxu0 0
        %1124 = vmatprep.subr.bf16.mxu0 0
        %1125 = vmatpush1.bf16.msra.mxu0 0
        %1126 = vmatprep.subr.bf16.mxu0 0
        %1127 = vmatpush1.bf16.msra.mxu0 0
        %1128 = vmatprep.subr.bf16.mxu0 0
        %1129 = vmatpush1.bf16.msra.mxu0 0
        %1130 = vmatprep.subr.bf16.mxu0 0
        %1131 = vmatpush1.bf16.msra.mxu0 0
        %1132 = vmatprep.subr.bf16.mxu0 0
        %1133 = vmatpush1.bf16.msra.mxu0 0
        %1134 = vmatprep.mubr.bf16.mxu0 0
        %1135 = vmatmul.mubr.bf16.gmra.mrb[0].mxu0 %v538
        %v1136 = vpop.f32.mrb[0].mxu0
        %v1137 = vadd.f32 %v1052, %v1136
        %v1138 = vpop.f32.mrb[0].mxu0
        %v1139 = vpop.f32.mrb[0].mxu0
        %v1140 = vadd.f32 %v1052, %v1139
        %v1141 = vpop.f32.mrb[0].mxu0
        %1142 = vmatprep.mubr.bf16.mxu0 0
        %1143 = vmatmul.mubr.bf16.gmra.mrb[0].mxu0 %v539
        %v1144 = vpop.f32.mrb[0].mxu0
        %v1145 = vadd.f32 %v1052, %v1144
        %v1146 = vpop.f32.mrb[0].mxu0
        %v1147 = vpop.f32.mrb[0].mxu0
        %v1148 = vadd.f32 %v1052, %v1147
        %v1149 = vpop.f32.mrb[0].mxu0
        %1150 = vmatprep.mubr.bf16.mxu0 0
        %1151 = vmatmul.mubr.bf16.gmra.mrb[0].mxu0 %v540
        %v1152 = vpop.f32.mrb[0].mxu0
        %v1153 = vadd.f32 %v1052, %v1152
        %v1154 = vpop.f32.mrb[0].mxu0
        %v1155 = vpop.f32.mrb[0].mxu0
        %v1156 = vadd.f32 %v1052, %v1155
        %v1157 = vpop.f32.mrb[0].mxu0
        %1158 = vmatprep.mubr.bf16.mxu0 0
        %1159 = vmatmul.mubr.bf16.gmra.mrb[0].mxu0 %v541
        %v1160 = vpop.f32.mrb[0].mxu0
        %v1161 = vadd.f32 %v1052, %v1160
        %v1162 = vpop.f32.mrb[0].mxu0
        %v1163 = vpop.f32.mrb[0].mxu0
        %v1164 = vadd.f32 %v1052, %v1163
        %v1165 = vpop.f32.mrb[0].mxu0
        %1166 = vmatprep.mubr.bf16.mxu0 0
        %1167 = vmatmul.mubr.bf16.gmra.mrb[0].mxu0 %v542
        %v1168 = vpop.f32.mrb[0].mxu0
        %v1169 = vadd.f32 %v1052, %v1168
        %v1170 = vpop.f32.mrb[0].mxu0
        %v1171 = vpop.f32.mrb[0].mxu0
        %v1172 = vadd.f32 %v1052, %v1171
        %v1173 = vpop.f32.mrb[0].mxu0
        %1174 = vmatprep.mubr.bf16.mxu0 0
        %1175 = vmatmul.mubr.bf16.gmra.mrb[0].mxu0 %v543
        %v1176 = vpop.f32.mrb[0].mxu0
        %v1177 = vadd.f32 %v1052, %v1176
        %v1178 = vpop.f32.mrb[0].mxu0
        %v1179 = vpop.f32.mrb[0].mxu0
        %v1180 = vadd.f32 %v1052, %v1179
        %v1181 = vpop.f32.mrb[0].mxu0
        %1182 = vmatprep.mubr.bf16.mxu0 0
        %1183 = vmatmul.mubr.bf16.gmra.mrb[0].mxu0 %v544
        %v1184 = vpop.f32.mrb[0].mxu0
        %v1185 = vadd.f32 %v1052, %v1184
        %v1186 = vpop.f32.mrb[0].mxu0
        %v1187 = vpop.f32.mrb[0].mxu0
        %v1188 = vadd.f32 %v1052, %v1187
        %v1189 = vpop.f32.mrb[0].mxu0
        %1190 = vmatprep.mubr.bf16.mxu0 0
        %1191 = vmatmul.mubr.bf16.gmra.mrb[0].mxu0 %v545
        %v1192 = vpop.f32.mrb[0].mxu0
        %v1193 = vadd.f32 %v1052, %v1192
        %v1194 = vpop.f32.mrb[0].mxu0
        %v1195 = vpop.f32.mrb[0].mxu0
        %v1196 = vadd.f32 %v1052, %v1195
        %v1197 = vpop.f32.mrb[0].mxu0
        %1198 = vmatprep.mubr.bf16.mxu0 0
        %1199 = vmatmul.mubr.bf16.gmra.mrb[0].mxu0 %v546
        %v1200 = vpop.f32.mrb[0].mxu0
        %v1201 = vadd.f32 %v1052, %v1200
        %v1202 = vpop.f32.mrb[0].mxu0
        %v1203 = vpop.f32.mrb[0].mxu0
        %v1204 = vadd.f32 %v1052, %v1203
        %v1205 = vpop.f32.mrb[0].mxu0
        %1206 = vmatprep.mubr.bf16.mxu0 0
        %1207 = vmatmul.mubr.bf16.gmra.mrb[0].mxu0 %v547
        %v1208 = vpop.f32.mrb[0].mxu0
        %v1209 = vadd.f32 %v1052, %v1208
        %v1210 = vpop.f32.mrb[0].mxu0
        %v1211 = vpop.f32.mrb[0].mxu0
        %v1212 = vadd.f32 %v1052, %v1211
        %v1213 = vpop.f32.mrb[0].mxu0
        %1214 = vmatprep.mubr.bf16.mxu0 0
        %1215 = vmatmul.mubr.bf16.gmra.mrb[0].mxu0 %v548
        %v1216 = vpop.f32.mrb[0].mxu0
        %v1217 = vadd.f32 %v1052, %v1216
        %v1218 = vpop.f32.mrb[0].mxu0
        %v1219 = vpop.f32.mrb[0].mxu0
        %v1220 = vadd.f32 %v1052, %v1219
        %v1221 = vpop.f32.mrb[0].mxu0
        %1222 = vmatprep.mubr.bf16.mxu0 0
        %1223 = vmatmul.mubr.bf16.gmra.mrb[0].mxu0 %v549
        %v1224 = vpop.f32.mrb[0].mxu0
        %v1225 = vadd.f32 %v1052, %v1224
        %v1226 = vpop.f32.mrb[0].mxu0
        %v1227 = vpop.f32.mrb[0].mxu0
        %v1228 = vadd.f32 %v1052, %v1227
        %v1229 = vpop.f32.mrb[0].mxu0
        %1230 = vmatprep.mubr.bf16.mxu0 0
        %1231 = vmatmul.mubr.bf16.gmra.mrb[0].mxu0 %v550
        %v1232 = vpop.f32.mrb[0].mxu0
        %v1233 = vadd.f32 %v1052, %v1232
        %v1234 = vpop.f32.mrb[0].mxu0
        %v1235 = vpop.f32.mrb[0].mxu0
        %v1236 = vadd.f32 %v1052, %v1235
        %v1237 = vpop.f32.mrb[0].mxu0
        %1238 = vmatprep.mubr.bf16.mxu0 0
        %1239 = vmatmul.mubr.bf16.gmra.mrb[0].mxu0 %v551
        %v1240 = vpop.f32.mrb[0].mxu0
        %v1241 = vadd.f32 %v1052, %v1240
        %v1242 = vpop.f32.mrb[0].mxu0
        %v1243 = vpop.f32.mrb[0].mxu0
        %v1244 = vadd.f32 %v1052, %v1243
        %v1245 = vpop.f32.mrb[0].mxu0
        %1246 = vmatprep.mubr.bf16.mxu0 0
        %1247 = vmatmul.mubr.bf16.gmra.mrb[0].mxu0 %v552
        %v1248 = vpop.f32.mrb[0].mxu0
        %v1249 = vadd.f32 %v1052, %v1248
        %v1250 = vpop.f32.mrb[0].mxu0
        %v1251 = vpop.f32.mrb[0].mxu0
        %v1252 = vadd.f32 %v1052, %v1251
        %v1253 = vpop.f32.mrb[0].mxu0
        %1254 = vmatprep.mubr.bf16.mxu0 0
        %1255 = vmatmul.mubr.bf16.gmra.mrb[0].mxu0 %v553
        %v1256 = vpop.f32.mrb[0].mxu0
        %v1257 = vadd.f32 %v1052, %v1256
        %v1258 = vpop.f32.mrb[0].mxu0
        %v1259 = vpop.f32.mrb[0].mxu0
        %v1260 = vadd.f32 %v1052, %v1259
        %v1261 = vpop.f32.mrb[0].mxu0
        %1262 = vmatprep.mubr.bf16.mxu0 0
        %1263 = vmatmul.mubr.bf16.gmra.mrb[0].mxu0 %v554
        %v1264 = vpop.f32.mrb[0].mxu0
        %v1265 = vadd.f32 %v1052, %v1264
        %v1266 = vpop.f32.mrb[0].mxu0
        %v1267 = vpop.f32.mrb[0].mxu0
        %v1268 = vadd.f32 %v1052, %v1267
        %v1269 = vpop.f32.mrb[0].mxu0
        %1270 = vmatprep.mubr.bf16.mxu0 0
        %1271 = vmatmul.mubr.bf16.gmra.mrb[0].mxu0 %v555
        %v1272 = vpop.f32.mrb[0].mxu0
        %v1273 = vadd.f32 %v1052, %v1272
        %v1274 = vpop.f32.mrb[0].mxu0
        %v1275 = vpop.f32.mrb[0].mxu0
        %v1276 = vadd.f32 %v1052, %v1275
        %v1277 = vpop.f32.mrb[0].mxu0
        %1278 = vmatprep.mubr.bf16.mxu0 0
        %1279 = vmatmul.mubr.bf16.gmra.mrb[0].mxu0 %v556
        %v1280 = vpop.f32.mrb[0].mxu0
        %v1281 = vadd.f32 %v1052, %v1280
        %v1282 = vpop.f32.mrb[0].mxu0
        %v1283 = vpop.f32.mrb[0].mxu0
        %v1284 = vadd.f32 %v1052, %v1283
        %v1285 = vpop.f32.mrb[0].mxu0
        %1286 = vmatprep.mubr.bf16.mxu0 0
        %1287 = vmatmul.mubr.bf16.gmra.mrb[0].mxu0 %v557
        %v1288 = vpop.f32.mrb[0].mxu0
        %v1289 = vadd.f32 %v1052, %v1288
        %v1290 = vpop.f32.mrb[0].mxu0
        %v1291 = vpop.f32.mrb[0].mxu0
        %v1292 = vadd.f32 %v1052, %v1291
        %v1293 = vpop.f32.mrb[0].mxu0
        %1294 = vmatprep.mubr.bf16.mxu0 0
        %1295 = vmatmul.mubr.bf16.gmra.mrb[0].mxu0 %v558
        %v1296 = vpop.f32.mrb[0].mxu0
        %v1297 = vadd.f32 %v1052, %v1296
        %v1298 = vpop.f32.mrb[0].mxu0
        %v1299 = vpop.f32.mrb[0].mxu0
        %v1300 = vadd.f32 %v1052, %v1299
        %v1301 = vpop.f32.mrb[0].mxu0
        %1302 = vmatprep.mubr.bf16.mxu0 0
        %1303 = vmatmul.mubr.bf16.gmra.mrb[0].mxu0 %v559
        %v1304 = vpop.f32.mrb[0].mxu0
        %v1305 = vadd.f32 %v1052, %v1304
        %v1306 = vpop.f32.mrb[0].mxu0
        %v1307 = vpop.f32.mrb[0].mxu0
        %v1308 = vadd.f32 %v1052, %v1307
        %v1309 = vpop.f32.mrb[0].mxu0
        %1310 = vmatprep.mubr.bf16.mxu0 0
        %1311 = vmatmul.mubr.bf16.gmra.mrb[0].mxu0 %v560
        %v1312 = vpop.f32.mrb[0].mxu0
        %v1313 = vadd.f32 %v1052, %v1312
        %v1314 = vpop.f32.mrb[0].mxu0
        %v1315 = vpop.f32.mrb[0].mxu0
        %v1316 = vadd.f32 %v1052, %v1315
        %v1317 = vpop.f32.mrb[0].mxu0
        %1318 = vmatprep.mubr.bf16.mxu0 0
        %1319 = vmatmul.mubr.bf16.gmra.mrb[0].mxu0 %v561
        %v1320 = vpop.f32.mrb[0].mxu0
        %v1321 = vadd.f32 %v1052, %v1320
        %v1322 = vpop.f32.mrb[0].mxu0
        %v1323 = vpop.f32.mrb[0].mxu0
        %v1324 = vadd.f32 %v1052, %v1323
        %v1325 = vpop.f32.mrb[0].mxu0
        %1326 = vmatprep.mubr.bf16.mxu0 0
        %1327 = vmatmul.mubr.bf16.gmra.mrb[0].mxu0 %v562
        %v1328 = vpop.f32.mrb[0].mxu0
        %v1329 = vadd.f32 %v1052, %v1328
        %v1330 = vpop.f32.mrb[0].mxu0
        %v1331 = vpop.f32.mrb[0].mxu0
        %v1332 = vadd.f32 %v1052, %v1331
        %v1333 = vpop.f32.mrb[0].mxu0
        %1334 = vmatprep.mubr.bf16.mxu0 0
        %1335 = vmatmul.mubr.bf16.gmra.mrb[0].mxu0 %v563
        %v1336 = vpop.f32.mrb[0].mxu0
        %v1337 = vadd.f32 %v1052, %v1336
        %v1338 = vpop.f32.mrb[0].mxu0
        %v1339 = vpop.f32.mrb[0].mxu0
        %v1340 = vadd.f32 %v1052, %v1339
        %v1341 = vpop.f32.mrb[0].mxu0
        %1342 = vmatprep.mubr.bf16.mxu0 0
        %1343 = vmatmul.mubr.bf16.gmra.mrb[0].mxu0 %v564
        %v1344 = vpop.f32.mrb[0].mxu0
        %v1345 = vadd.f32 %v1052, %v1344
        %v1346 = vpop.f32.mrb[0].mxu0
        %v1347 = vpop.f32.mrb[0].mxu0
        %v1348 = vadd.f32 %v1052, %v1347
        %v1349 = vpop.f32.mrb[0].mxu0
        %1350 = vmatprep.mubr.bf16.mxu0 0
        %1351 = vmatmul.mubr.bf16.gmra.mrb[0].mxu0 %v565
        %v1352 = vpop.f32.mrb[0].mxu0
        %v1353 = vadd.f32 %v1052, %v1352
        %v1354 = vpop.f32.mrb[0].mxu0
        %v1355 = vpop.f32.mrb[0].mxu0
        %v1356 = vadd.f32 %v1052, %v1355
        %v1357 = vpop.f32.mrb[0].mxu0
        %1358 = vmatprep.mubr.bf16.mxu0 0
        %1359 = vmatmul.mubr.bf16.gmra.mrb[0].mxu0 %v566
        %v1360 = vpop.f32.mrb[0].mxu0
        %v1361 = vadd.f32 %v1052, %v1360
        %v1362 = vpop.f32.mrb[0].mxu0
        %v1363 = vpop.f32.mrb[0].mxu0
        %v1364 = vadd.f32 %v1052, %v1363
        %v1365 = vpop.f32.mrb[0].mxu0
        %1366 = vmatprep.mubr.bf16.mxu0 0
        %1367 = vmatmul.mubr.bf16.gmra.mrb[0].mxu0 %v567
        %v1368 = vpop.f32.mrb[0].mxu0
        %v1369 = vadd.f32 %v1052, %v1368
        %v1370 = vpop.f32.mrb[0].mxu0
        %v1371 = vpop.f32.mrb[0].mxu0
        %v1372 = vadd.f32 %v1052, %v1371
        %v1373 = vpop.f32.mrb[0].mxu0
        %1374 = vmatprep.mubr.bf16.mxu0 0
        %1375 = vmatmul.mubr.bf16.gmra.mrb[0].mxu0 %v568
        %v1376 = vpop.f32.mrb[0].mxu0
        %v1377 = vadd.f32 %v1052, %v1376
        %v1378 = vpop.f32.mrb[0].mxu0
        %v1379 = vpop.f32.mrb[0].mxu0
        %v1380 = vadd.f32 %v1052, %v1379
        %v1381 = vpop.f32.mrb[0].mxu0
        %1382 = vmatprep.mubr.bf16.mxu0 0
        %1383 = vmatmul.mubr.bf16.gmra.mrb[0].mxu0 %v569
        %v1384 = vpop.f32.mrb[0].mxu0
        %v1385 = vadd.f32 %v1052, %v1384
        %v1386 = vpop.f32.mrb[0].mxu0
        %v1387 = vpop.f32.mrb[0].mxu0
        %v1388 = vadd.f32 %v1052, %v1387
        %v1389 = vpop.f32.mrb[0].mxu0
        %1390 = vdwg.mxu0
        %1391 = vst [vmem:[%s384] sm:$0xff] %v713
        %1392 = vst [vmem:[%s384 + $0x8] sm:$0xff] %v715
        %1393 = vst [vmem:[%s384 + $0x10] sm:$0xff] %v717
        %1394 = vst [vmem:[%s384 + $0x18] sm:$0xff] %v719
        %1395 = vst [vmem:[%s384 + $0x20] sm:$0xff] %v723
        %1396 = vst [vmem:[%s384 + $0x28] sm:$0xff] %v725
        %1397 = vst [vmem:[%s384 + $0x30] sm:$0xff] %v727
        %1398 = vst [vmem:[%s384 + $0x38] sm:$0xff] %v729
        %1399 = vst [vmem:[%s384 + $0x40] sm:$0xff] %v733
        %1400 = vst [vmem:[%s384 + $0x48] sm:$0xff] %v735
        %1401 = vst [vmem:[%s384 + $0x50] sm:$0xff] %v737
        %1402 = vst [vmem:[%s384 + $0x58] sm:$0xff] %v739
        %1403 = vst [vmem:[%s384 + $0x60] sm:$0xff] %v743
        %1404 = vst [vmem:[%s384 + $0x68] sm:$0xff] %v745
        %1405 = vst [vmem:[%s384 + $0x70] sm:$0xff] %v747
        %1406 = vst [vmem:[%s384 + $0x78] sm:$0xff] %v749
        %1407 = vst [vmem:[%s384 + $0x80] sm:$0xff] %v753
        %1408 = vst [vmem:[%s384 + $0x88] sm:$0xff] %v755
        %1409 = vst [vmem:[%s384 + $0x90] sm:$0xff] %v757
        %1410 = vst [vmem:[%s384 + $0x98] sm:$0xff] %v759
        %1411 = vst [vmem:[%s384 + $0xa0] sm:$0xff] %v763
        %1412 = vst [vmem:[%s384 + $0xa8] sm:$0xff] %v765
        %1413 = vst [vmem:[%s384 + $0xb0] sm:$0xff] %v767
        %1414 = vst [vmem:[%s384 + $0xb8] sm:$0xff] %v769
        %1415 = vst [vmem:[%s384 + $0xc0] sm:$0xff] %v773
        %1416 = vst [vmem:[%s384 + $0xc8] sm:$0xff] %v775
        %1417 = vst [vmem:[%s384 + $0xd0] sm:$0xff] %v777
        %1418 = vst [vmem:[%s384 + $0xd8] sm:$0xff] %v779
        %1419 = vst [vmem:[%s384 + $0xe0] sm:$0xff] %v783
        %1420 = vst [vmem:[%s384 + $0xe8] sm:$0xff] %v785
        %1421 = vst [vmem:[%s384 + $0xf0] sm:$0xff] %v787
        %1422 = vst [vmem:[%s384 + $0xf8] sm:$0xff] %v789
        %1423 = vst [vmem:[%s384 + $0x100] sm:$0xff] %v793
        %1424 = vst [vmem:[%s384 + $0x108] sm:$0xff] %v795
        %1425 = vst [vmem:[%s384 + $0x110] sm:$0xff] %v797
        %1426 = vst [vmem:[%s384 + $0x118] sm:$0xff] %v799
        %1427 = vst [vmem:[%s384 + $0x120] sm:$0xff] %v803
        %1428 = vst [vmem:[%s384 + $0x128] sm:$0xff] %v805
        %1429 = vst [vmem:[%s384 + $0x130] sm:$0xff] %v807
        %1430 = vst [vmem:[%s384 + $0x138] sm:$0xff] %v809
        %1431 = vst [vmem:[%s384 + $0x140] sm:$0xff] %v813
        %1432 = vst [vmem:[%s384 + $0x148] sm:$0xff] %v815
        %1433 = vst [vmem:[%s384 + $0x150] sm:$0xff] %v817
        %1434 = vst [vmem:[%s384 + $0x158] sm:$0xff] %v819
        %1435 = vst [vmem:[%s384 + $0x160] sm:$0xff] %v823
        %1436 = vst [vmem:[%s384 + $0x168] sm:$0xff] %v825
        %1437 = vst [vmem:[%s384 + $0x170] sm:$0xff] %v827
        %1438 = vst [vmem:[%s384 + $0x178] sm:$0xff] %v829
        %1439 = vst [vmem:[%s384 + $0x180] sm:$0xff] %v833
        %1440 = vst [vmem:[%s384 + $0x188] sm:$0xff] %v835
        %1441 = vst [vmem:[%s384 + $0x190] sm:$0xff] %v837
        %1442 = vst [vmem:[%s384 + $0x198] sm:$0xff] %v839
        %1443 = vst [vmem:[%s384 + $0x1a0] sm:$0xff] %v843
        %1444 = vst [vmem:[%s384 + $0x1a8] sm:$0xff] %v845
        %1445 = vst [vmem:[%s384 + $0x1b0] sm:$0xff] %v847
        %1446 = vst [vmem:[%s384 + $0x1b8] sm:$0xff] %v849
        %1447 = vst [vmem:[%s384 + $0x1c0] sm:$0xff] %v853
        %1448 = vst [vmem:[%s384 + $0x1c8] sm:$0xff] %v855
        %1449 = vst [vmem:[%s384 + $0x1d0] sm:$0xff] %v857
        %1450 = vst [vmem:[%s384 + $0x1d8] sm:$0xff] %v859
        %1451 = vst [vmem:[%s384 + $0x1e0] sm:$0xff] %v863
        %1452 = vst [vmem:[%s384 + $0x1e8] sm:$0xff] %v865
        %1453 = vst [vmem:[%s384 + $0x1f0] sm:$0xff] %v867
        %1454 = vst [vmem:[%s384 + $0x1f8] sm:$0xff] %v869
        %1455 = vst [vmem:[%s384 + $0x200] sm:$0xff] %v873
        %1456 = vst [vmem:[%s384 + $0x208] sm:$0xff] %v875
        %1457 = vst [vmem:[%s384 + $0x210] sm:$0xff] %v877
        %1458 = vst [vmem:[%s384 + $0x218] sm:$0xff] %v879
        %1459 = vst [vmem:[%s384 + $0x220] sm:$0xff] %v883
        %1460 = vst [vmem:[%s384 + $0x228] sm:$0xff] %v885
        %1461 = vst [vmem:[%s384 + $0x230] sm:$0xff] %v887
        %1462 = vst [vmem:[%s384 + $0x238] sm:$0xff] %v889
        %1463 = vst [vmem:[%s384 + $0x240] sm:$0xff] %v893
        %1464 = vst [vmem:[%s384 + $0x248] sm:$0xff] %v895
        %1465 = vst [vmem:[%s384 + $0x250] sm:$0xff] %v897
        %1466 = vst [vmem:[%s384 + $0x258] sm:$0xff] %v899
        %1467 = vst [vmem:[%s384 + $0x260] sm:$0xff] %v903
        %1468 = vst [vmem:[%s384 + $0x268] sm:$0xff] %v905
        %1469 = vst [vmem:[%s384 + $0x270] sm:$0xff] %v907
        %1470 = vst [vmem:[%s384 + $0x278] sm:$0xff] %v909
        %1471 = vst [vmem:[%s384 + $0x280] sm:$0xff] %v913
        %1472 = vst [vmem:[%s384 + $0x288] sm:$0xff] %v915
        %1473 = vst [vmem:[%s384 + $0x290] sm:$0xff] %v917
        %1474 = vst [vmem:[%s384 + $0x298] sm:$0xff] %v919
        %1475 = vst [vmem:[%s384 + $0x2a0] sm:$0xff] %v923
        %1476 = vst [vmem:[%s384 + $0x2a8] sm:$0xff] %v925
        %1477 = vst [vmem:[%s384 + $0x2b0] sm:$0xff] %v927
        %1478 = vst [vmem:[%s384 + $0x2b8] sm:$0xff] %v929
        %1479 = vst [vmem:[%s384 + $0x2c0] sm:$0xff] %v933
        %1480 = vst [vmem:[%s384 + $0x2c8] sm:$0xff] %v935
        %1481 = vst [vmem:[%s384 + $0x2d0] sm:$0xff] %v937
        %1482 = vst [vmem:[%s384 + $0x2d8] sm:$0xff] %v939
        %1483 = vst [vmem:[%s384 + $0x2e0] sm:$0xff] %v943
        %1484 = vst [vmem:[%s384 + $0x2e8] sm:$0xff] %v945
        %1485 = vst [vmem:[%s384 + $0x2f0] sm:$0xff] %v947
        %1486 = vst [vmem:[%s384 + $0x2f8] sm:$0xff] %v949
        %1487 = vst [vmem:[%s384 + $0x300] sm:$0xff] %v953
        %1488 = vst [vmem:[%s384 + $0x308] sm:$0xff] %v955
        %1489 = vst [vmem:[%s384 + $0x310] sm:$0xff] %v957
        %1490 = vst [vmem:[%s384 + $0x318] sm:$0xff] %v959
        %1491 = vst [vmem:[%s384 + $0x320] sm:$0xff] %v963
        %1492 = vst [vmem:[%s384 + $0x328] sm:$0xff] %v965
        %1493 = vst [vmem:[%s384 + $0x330] sm:$0xff] %v967
        %1494 = vst [vmem:[%s384 + $0x338] sm:$0xff] %v969
        %1495 = vst [vmem:[%s384 + $0x340] sm:$0xff] %v973
        %1496 = vst [vmem:[%s384 + $0x348] sm:$0xff] %v975
        %1497 = vst [vmem:[%s384 + $0x350] sm:$0xff] %v977
        %1498 = vst [vmem:[%s384 + $0x358] sm:$0xff] %v979
        %1499 = vst [vmem:[%s384 + $0x360] sm:$0xff] %v983
        %1500 = vst [vmem:[%s384 + $0x368] sm:$0xff] %v985
        %1501 = vst [vmem:[%s384 + $0x370] sm:$0xff] %v987
        %1502 = vst [vmem:[%s384 + $0x378] sm:$0xff] %v989
        %1503 = vst [vmem:[%s384 + $0x380] sm:$0xff] %v993
        %1504 = vst [vmem:[%s384 + $0x388] sm:$0xff] %v995
        %1505 = vst [vmem:[%s384 + $0x390] sm:$0xff] %v997
        %1506 = vst [vmem:[%s384 + $0x398] sm:$0xff] %v999
        %1507 = vst [vmem:[%s384 + $0x3a0] sm:$0xff] %v1003
        %1508 = vst [vmem:[%s384 + $0x3a8] sm:$0xff] %v1005
        %1509 = vst [vmem:[%s384 + $0x3b0] sm:$0xff] %v1007
        %1510 = vst [vmem:[%s384 + $0x3b8] sm:$0xff] %v1009
        %1511 = vst [vmem:[%s384 + $0x3c0] sm:$0xff] %v1013
        %1512 = vst [vmem:[%s384 + $0x3c8] sm:$0xff] %v1015
        %1513 = vst [vmem:[%s384 + $0x3d0] sm:$0xff] %v1017
        %1514 = vst [vmem:[%s384 + $0x3d8] sm:$0xff] %v1019
        %1515 = vst [vmem:[%s384 + $0x3e0] sm:$0xff] %v1023
        %1516 = vst [vmem:[%s384 + $0x3e8] sm:$0xff] %v1025
        %1517 = vst [vmem:[%s384 + $0x3f0] sm:$0xff] %v1027
        %1518 = vst [vmem:[%s384 + $0x3f8] sm:$0xff] %v1029
        %1519 = vst [vmem:[%s391] sm:$0xff] %v1137
        %1520 = vst [vmem:[%s391 + $0x8] sm:$0xff] %v1140
        %1521 = vst [vmem:[%s391 + $0x10] sm:$0xff] %v1145
        %1522 = vst [vmem:[%s391 + $0x18] sm:$0xff] %v1148
        %1523 = vst [vmem:[%s391 + $0x20] sm:$0xff] %v1153
        %1524 = vst [vmem:[%s391 + $0x28] sm:$0xff] %v1156
        %1525 = vst [vmem:[%s391 + $0x30] sm:$0xff] %v1161
        %1526 = vst [vmem:[%s391 + $0x38] sm:$0xff] %v1164
        %1527 = vst [vmem:[%s391 + $0x40] sm:$0xff] %v1169
        %1528 = vst [vmem:[%s391 + $0x48] sm:$0xff] %v1172
        %1529 = vst [vmem:[%s391 + $0x50] sm:$0xff] %v1177
        %1530 = vst [vmem:[%s391 + $0x58] sm:$0xff] %v1180
        %1531 = vst [vmem:[%s391 + $0x60] sm:$0xff] %v1185
        %1532 = vst [vmem:[%s391 + $0x68] sm:$0xff] %v1188
        %1533 = vst [vmem:[%s391 + $0x70] sm:$0xff] %v1193
        %1534 = vst [vmem:[%s391 + $0x78] sm:$0xff] %v1196
        %1535 = vst [vmem:[%s391 + $0x80] sm:$0xff] %v1201
        %1536 = vst [vmem:[%s391 + $0x88] sm:$0xff] %v1204
        %1537 = vst [vmem:[%s391 + $0x90] sm:$0xff] %v1209
        %1538 = vst [vmem:[%s391 + $0x98] sm:$0xff] %v1212
        %1539 = vst [vmem:[%s391 + $0xa0] sm:$0xff] %v1217
        %1540 = vst [vmem:[%s391 + $0xa8] sm:$0xff] %v1220
        %1541 = vst [vmem:[%s391 + $0xb0] sm:$0xff] %v1225
        %1542 = vst [vmem:[%s391 + $0xb8] sm:$0xff] %v1228
        %1543 = vst [vmem:[%s391 + $0xc0] sm:$0xff] %v1233
        %1544 = vst [vmem:[%s391 + $0xc8] sm:$0xff] %v1236
        %1545 = vst [vmem:[%s391 + $0xd0] sm:$0xff] %v1241
        %1546 = vst [vmem:[%s391 + $0xd8] sm:$0xff] %v1244
        %1547 = vst [vmem:[%s391 + $0xe0] sm:$0xff] %v1249
        %1548 = vst [vmem:[%s391 + $0xe8] sm:$0xff] %v1252
        %1549 = vst [vmem:[%s391 + $0xf0] sm:$0xff] %v1257
        %1550 = vst [vmem:[%s391 + $0xf8] sm:$0xff] %v1260
        %1551 = vst [vmem:[%s391 + $0x100] sm:$0xff] %v1265
        %1552 = vst [vmem:[%s391 + $0x108] sm:$0xff] %v1268
        %1553 = vst [vmem:[%s391 + $0x110] sm:$0xff] %v1273
        %1554 = vst [vmem:[%s391 + $0x118] sm:$0xff] %v1276
        %1555 = vst [vmem:[%s391 + $0x120] sm:$0xff] %v1281
        %1556 = vst [vmem:[%s391 + $0x128] sm:$0xff] %v1284
        %1557 = vst [vmem:[%s391 + $0x130] sm:$0xff] %v1289
        %1558 = vst [vmem:[%s391 + $0x138] sm:$0xff] %v1292
        %1559 = vst [vmem:[%s391 + $0x140] sm:$0xff] %v1297
        %1560 = vst [vmem:[%s391 + $0x148] sm:$0xff] %v1300
        %1561 = vst [vmem:[%s391 + $0x150] sm:$0xff] %v1305
        %1562 = vst [vmem:[%s391 + $0x158] sm:$0xff] %v1308
        %1563 = vst [vmem:[%s391 + $0x160] sm:$0xff] %v1313
        %1564 = vst [vmem:[%s391 + $0x168] sm:$0xff] %v1316
        %1565 = vst [vmem:[%s391 + $0x170] sm:$0xff] %v1321
        %1566 = vst [vmem:[%s391 + $0x178] sm:$0xff] %v1324
        %1567 = vst [vmem:[%s391 + $0x180] sm:$0xff] %v1329
        %1568 = vst [vmem:[%s391 + $0x188] sm:$0xff] %v1332
        %1569 = vst [vmem:[%s391 + $0x190] sm:$0xff] %v1337
        %1570 = vst [vmem:[%s391 + $0x198] sm:$0xff] %v1340
        %1571 = vst [vmem:[%s391 + $0x1a0] sm:$0xff] %v1345
        %1572 = vst [vmem:[%s391 + $0x1a8] sm:$0xff] %v1348
        %1573 = vst [vmem:[%s391 + $0x1b0] sm:$0xff] %v1353
        %1574 = vst [vmem:[%s391 + $0x1b8] sm:$0xff] %v1356
        %1575 = vst [vmem:[%s391 + $0x1c0] sm:$0xff] %v1361
        %1576 = vst [vmem:[%s391 + $0x1c8] sm:$0xff] %v1364
        %1577 = vst [vmem:[%s391 + $0x1d0] sm:$0xff] %v1369
        %1578 = vst [vmem:[%s391 + $0x1d8] sm:$0xff] %v1372
        %1579 = vst [vmem:[%s391 + $0x1e0] sm:$0xff] %v1377
        %1580 = vst [vmem:[%s391 + $0x1e8] sm:$0xff] %v1380
        %1581 = vst [vmem:[%s391 + $0x1f0] sm:$0xff] %v1385
        %1582 = vst [vmem:[%s391 + $0x1f8] sm:$0xff] %v1388
        %v1583 = vadd.f32 %v713, %v717
        %v1584 = vadd.f32 %v1583, %v723
        %v1585 = vadd.f32 %v1584, %v727
        %v1586 = vadd.f32 %v1585, %v733
        %v1587 = vadd.f32 %v1586, %v737
        %v1588 = vadd.f32 %v1587, %v743
        %v1589 = vadd.f32 %v1588, %v747
        %v1590 = vadd.f32 %v1589, %v753
        %v1591 = vadd.f32 %v1590, %v757
        %v1592 = vadd.f32 %v1591, %v763
        %v1593 = vadd.f32 %v1592, %v767
        %v1594 = vadd.f32 %v1593, %v773
        %v1595 = vadd.f32 %v1594, %v777
        %v1596 = vadd.f32 %v1595, %v783
        %v1597 = vadd.f32 %v1596, %v787
        %v1598 = vadd.f32 %v1597, %v793
        %v1599 = vadd.f32 %v1598, %v797
        %v1600 = vadd.f32 %v1599, %v803
        %v1601 = vadd.f32 %v1600, %v807
        %v1602 = vadd.f32 %v1601, %v813
        %v1603 = vadd.f32 %v1602, %v817
        %v1604 = vadd.f32 %v1603, %v823
        %v1605 = vadd.f32 %v1604, %v827
        %v1606 = vadd.f32 %v1605, %v833
        %v1607 = vadd.f32 %v1606, %v837
        %v1608 = vadd.f32 %v1607, %v843
        %v1609 = vadd.f32 %v1608, %v847
        %v1610 = vadd.f32 %v1609, %v853
        %v1611 = vadd.f32 %v1610, %v857
        %v1612 = vadd.f32 %v1611, %v863
        %v1613 = vadd.f32 %v1612, %v867
        %v1614 = vadd.f32 %v1613, %v873
        %v1615 = vadd.f32 %v1614, %v877
        %v1616 = vadd.f32 %v1615, %v883
        %v1617 = vadd.f32 %v1616, %v887
        %v1618 = vadd.f32 %v1617, %v893
        %v1619 = vadd.f32 %v1618, %v897
        %v1620 = vadd.f32 %v1619, %v903
        %v1621 = vadd.f32 %v1620, %v907
        %v1622 = vadd.f32 %v1621, %v913
        %v1623 = vadd.f32 %v1622, %v917
        %v1624 = vadd.f32 %v1623, %v923
        %v1625 = vadd.f32 %v1624, %v927
        %v1626 = vadd.f32 %v1625, %v933
        %v1627 = vadd.f32 %v1626, %v937
        %v1628 = vadd.f32 %v1627, %v943
        %v1629 = vadd.f32 %v1628, %v947
        %v1630 = vadd.f32 %v1629, %v953
        %v1631 = vadd.f32 %v1630, %v957
        %v1632 = vadd.f32 %v1631, %v963
        %v1633 = vadd.f32 %v1632, %v967
        %v1634 = vadd.f32 %v1633, %v973
        %v1635 = vadd.f32 %v1634, %v977
        %v1636 = vadd.f32 %v1635, %v983
        %v1637 = vadd.f32 %v1636, %v987
        %v1638 = vadd.f32 %v1637, %v993
        %v1639 = vadd.f32 %v1638, %v997
        %v1640 = vadd.f32 %v1639, %v1003
        %v1641 = vadd.f32 %v1640, %v1007
        %v1642 = vadd.f32 %v1641, %v1013
        %v1643 = vadd.f32 %v1642, %v1017
        %v1644 = vadd.f32 %v1643, %v1023
        %v1645 = vadd.f32 %v1644, %v1027
        %v1646 = vrot.slane %v1645, 4
        %v1647 = vadd.f32 %v1645, %v1646
        %v1648 = vrot.slane %v1647, 2
        %v1649 = vadd.f32 %v1647, %v1648
        %v1650 = vrot.slane %v1649, 1
        %v1651 = vadd.f32 %v1649, %v1650
        %v1652 = vadd.f32 %v715, %v719
        %v1653 = vadd.f32 %v1652, %v725
        %v1654 = vadd.f32 %v1653, %v729
        %v1655 = vadd.f32 %v1654, %v735
        %v1656 = vadd.f32 %v1655, %v739
        %v1657 = vadd.f32 %v1656, %v745
        %v1658 = vadd.f32 %v1657, %v749
        %v1659 = vadd.f32 %v1658, %v755
        %v1660 = vadd.f32 %v1659, %v759
        %v1661 = vadd.f32 %v1660, %v765
        %v1662 = vadd.f32 %v1661, %v769
        %v1663 = vadd.f32 %v1662, %v775
        %v1664 = vadd.f32 %v1663, %v779
        %v1665 = vadd.f32 %v1664, %v785
        %v1666 = vadd.f32 %v1665, %v789
        %v1667 = vadd.f32 %v1666, %v795
        %v1668 = vadd.f32 %v1667, %v799
        %v1669 = vadd.f32 %v1668, %v805
        %v1670 = vadd.f32 %v1669, %v809
        %v1671 = vadd.f32 %v1670, %v815
        %v1672 = vadd.f32 %v1671, %v819
        %v1673 = vadd.f32 %v1672, %v825
        %v1674 = vadd.f32 %v1673, %v829
        %v1675 = vadd.f32 %v1674, %v835
        %v1676 = vadd.f32 %v1675, %v839
        %v1677 = vadd.f32 %v1676, %v845
        %v1678 = vadd.f32 %v1677, %v849
        %v1679 = vadd.f32 %v1678, %v855
        %v1680 = vadd.f32 %v1679, %v859
        %v1681 = vadd.f32 %v1680, %v865
        %v1682 = vadd.f32 %v1681, %v869
        %v1683 = vadd.f32 %v1682, %v875
        %v1684 = vadd.f32 %v1683, %v879
        %v1685 = vadd.f32 %v1684, %v885
        %v1686 = vadd.f32 %v1685, %v889
        %v1687 = vadd.f32 %v1686, %v895
        %v1688 = vadd.f32 %v1687, %v899
        %v1689 = vadd.f32 %v1688, %v905
        %v1690 = vadd.f32 %v1689, %v909
        %v1691 = vadd.f32 %v1690, %v915
        %v1692 = vadd.f32 %v1691, %v919
        %v1693 = vadd.f32 %v1692, %v925
        %v1694 = vadd.f32 %v1693, %v929
        %v1695 = vadd.f32 %v1694, %v935
        %v1696 = vadd.f32 %v1695, %v939
        %v1697 = vadd.f32 %v1696, %v945
        %v1698 = vadd.f32 %v1697, %v949
        %v1699 = vadd.f32 %v1698, %v955
        %v1700 = vadd.f32 %v1699, %v959
        %v1701 = vadd.f32 %v1700, %v965
        %v1702 = vadd.f32 %v1701, %v969
        %v1703 = vadd.f32 %v1702, %v975
        %v1704 = vadd.f32 %v1703, %v979
        %v1705 = vadd.f32 %v1704, %v985
        %v1706 = vadd.f32 %v1705, %v989
        %v1707 = vadd.f32 %v1706, %v995
        %v1708 = vadd.f32 %v1707, %v999
        %v1709 = vadd.f32 %v1708, %v1005
        %v1710 = vadd.f32 %v1709, %v1009
        %v1711 = vadd.f32 %v1710, %v1015
        %v1712 = vadd.f32 %v1711, %v1019
        %v1713 = vadd.f32 %v1712, %v1025
        %v1714 = vadd.f32 %v1713, %v1029
        %v1715 = vrot.slane %v1714, 4
        %v1716 = vadd.f32 %v1714, %v1715
        %v1717 = vrot.slane %v1716, 2
        %v1718 = vadd.f32 %v1716, %v1717
        %v1719 = vrot.slane %v1718, 1
        %v1720 = vadd.f32 %v1718, %v1719
        %v1721 = vmul.f32 %v713, %v713
        %v1722 = vmul.f32 %v715, %v715
        %v1723 = vmul.f32 %v717, %v717
        %v1724 = vmul.f32 %v719, %v719
        %v1725 = vmul.f32 %v723, %v723
        %v1726 = vmul.f32 %v725, %v725
        %v1727 = vmul.f32 %v727, %v727
        %v1728 = vmul.f32 %v729, %v729
        %v1729 = vmul.f32 %v733, %v733
        %v1730 = vmul.f32 %v735, %v735
        %v1731 = vmul.f32 %v737, %v737
        %v1732 = vmul.f32 %v739, %v739
        %v1733 = vmul.f32 %v743, %v743
        %v1734 = vmul.f32 %v745, %v745
        %v1735 = vmul.f32 %v747, %v747
        %v1736 = vmul.f32 %v749, %v749
        %v1737 = vmul.f32 %v753, %v753
        %v1738 = vmul.f32 %v755, %v755
        %v1739 = vmul.f32 %v757, %v757
        %v1740 = vmul.f32 %v759, %v759
        %v1741 = vmul.f32 %v763, %v763
        %v1742 = vmul.f32 %v765, %v765
        %v1743 = vmul.f32 %v767, %v767
        %v1744 = vmul.f32 %v769, %v769
        %v1745 = vmul.f32 %v773, %v773
        %v1746 = vmul.f32 %v775, %v775
        %v1747 = vmul.f32 %v777, %v777
        %v1748 = vmul.f32 %v779, %v779
        %v1749 = vmul.f32 %v783, %v783
        %v1750 = vmul.f32 %v785, %v785
        %v1751 = vmul.f32 %v787, %v787
        %v1752 = vmul.f32 %v789, %v789
        %v1753 = vmul.f32 %v793, %v793
        %v1754 = vmul.f32 %v795, %v795
        %v1755 = vmul.f32 %v797, %v797
        %v1756 = vmul.f32 %v799, %v799
        %v1757 = vmul.f32 %v803, %v803
        %v1758 = vmul.f32 %v805, %v805
        %v1759 = vmul.f32 %v807, %v807
        %v1760 = vmul.f32 %v809, %v809
        %v1761 = vmul.f32 %v813, %v813
        %v1762 = vmul.f32 %v815, %v815
        %v1763 = vmul.f32 %v817, %v817
        %v1764 = vmul.f32 %v819, %v819
        %v1765 = vmul.f32 %v823, %v823
        %v1766 = vmul.f32 %v825, %v825
        %v1767 = vmul.f32 %v827, %v827
        %v1768 = vmul.f32 %v829, %v829
        %v1769 = vmul.f32 %v833, %v833
        %v1770 = vmul.f32 %v835, %v835
        %v1771 = vmul.f32 %v837, %v837
        %v1772 = vmul.f32 %v839, %v839
        %v1773 = vmul.f32 %v843, %v843
        %v1774 = vmul.f32 %v845, %v845
        %v1775 = vmul.f32 %v847, %v847
        %v1776 = vmul.f32 %v849, %v849
        %v1777 = vmul.f32 %v853, %v853
        %v1778 = vmul.f32 %v855, %v855
        %v1779 = vmul.f32 %v857, %v857
        %v1780 = vmul.f32 %v859, %v859
        %v1781 = vmul.f32 %v863, %v863
        %v1782 = vmul.f32 %v865, %v865
        %v1783 = vmul.f32 %v867, %v867
        %v1784 = vmul.f32 %v869, %v869
        %v1785 = vmul.f32 %v873, %v873
        %v1786 = vmul.f32 %v875, %v875
        %v1787 = vmul.f32 %v877, %v877
        %v1788 = vmul.f32 %v879, %v879
        %v1789 = vmul.f32 %v883, %v883
        %v1790 = vmul.f32 %v885, %v885
        %v1791 = vmul.f32 %v887, %v887
        %v1792 = vmul.f32 %v889, %v889
        %v1793 = vmul.f32 %v893, %v893
        %v1794 = vmul.f32 %v895, %v895
        %v1795 = vmul.f32 %v897, %v897
        %v1796 = vmul.f32 %v899, %v899
        %v1797 = vmul.f32 %v903, %v903
        %v1798 = vmul.f32 %v905, %v905
        %v1799 = vmul.f32 %v907, %v907
        %v1800 = vmul.f32 %v909, %v909
        %v1801 = vmul.f32 %v913, %v913
        %v1802 = vmul.f32 %v915, %v915
        %v1803 = vmul.f32 %v917, %v917
        %v1804 = vmul.f32 %v919, %v919
        %v1805 = vmul.f32 %v923, %v923
        %v1806 = vmul.f32 %v925, %v925
        %v1807 = vmul.f32 %v927, %v927
        %v1808 = vmul.f32 %v929, %v929
        %v1809 = vmul.f32 %v933, %v933
        %v1810 = vmul.f32 %v935, %v935
        %v1811 = vmul.f32 %v937, %v937
        %v1812 = vmul.f32 %v939, %v939
        %v1813 = vmul.f32 %v943, %v943
        %v1814 = vmul.f32 %v945, %v945
        %v1815 = vmul.f32 %v947, %v947
        %v1816 = vmul.f32 %v949, %v949
        %v1817 = vmul.f32 %v953, %v953
        %v1818 = vmul.f32 %v955, %v955
        %v1819 = vmul.f32 %v957, %v957
        %v1820 = vmul.f32 %v959, %v959
        %v1821 = vmul.f32 %v963, %v963
        %v1822 = vmul.f32 %v965, %v965
        %v1823 = vmul.f32 %v967, %v967
        %v1824 = vmul.f32 %v969, %v969
        %v1825 = vmul.f32 %v973, %v973
        %v1826 = vmul.f32 %v975, %v975
        %v1827 = vmul.f32 %v977, %v977
        %v1828 = vmul.f32 %v979, %v979
        %v1829 = vmul.f32 %v983, %v983
        %v1830 = vmul.f32 %v985, %v985
        %v1831 = vmul.f32 %v987, %v987
        %v1832 = vmul.f32 %v989, %v989
        %v1833 = vmul.f32 %v993, %v993
        %v1834 = vmul.f32 %v995, %v995
        %v1835 = vmul.f32 %v997, %v997
        %v1836 = vmul.f32 %v999, %v999
        %v1837 = vmul.f32 %v1003, %v1003
        %v1838 = vmul.f32 %v1005, %v1005
        %v1839 = vmul.f32 %v1007, %v1007
        %v1840 = vmul.f32 %v1009, %v1009
        %v1841 = vmul.f32 %v1013, %v1013
        %v1842 = vmul.f32 %v1015, %v1015
        %v1843 = vmul.f32 %v1017, %v1017
        %v1844 = vmul.f32 %v1019, %v1019
        %v1845 = vmul.f32 %v1023, %v1023
        %v1846 = vmul.f32 %v1025, %v1025
        %v1847 = vmul.f32 %v1027, %v1027
        %v1848 = vmul.f32 %v1029, %v1029
        %v1849 = vadd.f32 %v1721, %v1723
        %v1850 = vadd.f32 %v1849, %v1725
        %v1851 = vadd.f32 %v1850, %v1727
        %v1852 = vadd.f32 %v1851, %v1729
        %v1853 = vadd.f32 %v1852, %v1731
        %v1854 = vadd.f32 %v1853, %v1733
        %v1855 = vadd.f32 %v1854, %v1735
        %v1856 = vadd.f32 %v1855, %v1737
        %v1857 = vadd.f32 %v1856, %v1739
        %v1858 = vadd.f32 %v1857, %v1741
        %v1859 = vadd.f32 %v1858, %v1743
        %v1860 = vadd.f32 %v1859, %v1745
        %v1861 = vadd.f32 %v1860, %v1747
        %v1862 = vadd.f32 %v1861, %v1749
        %v1863 = vadd.f32 %v1862, %v1751
        %v1864 = vadd.f32 %v1863, %v1753
        %v1865 = vadd.f32 %v1864, %v1755
        %v1866 = vadd.f32 %v1865, %v1757
        %v1867 = vadd.f32 %v1866, %v1759
        %v1868 = vadd.f32 %v1867, %v1761
        %v1869 = vadd.f32 %v1868, %v1763
        %v1870 = vadd.f32 %v1869, %v1765
        %v1871 = vadd.f32 %v1870, %v1767
        %v1872 = vadd.f32 %v1871, %v1769
        %v1873 = vadd.f32 %v1872, %v1771
        %v1874 = vadd.f32 %v1873, %v1773
        %v1875 = vadd.f32 %v1874, %v1775
        %v1876 = vadd.f32 %v1875, %v1777
        %v1877 = vadd.f32 %v1876, %v1779
        %v1878 = vadd.f32 %v1877, %v1781
        %v1879 = vadd.f32 %v1878, %v1783
        %v1880 = vadd.f32 %v1879, %v1785
        %v1881 = vadd.f32 %v1880, %v1787
        %v1882 = vadd.f32 %v1881, %v1789
        %v1883 = vadd.f32 %v1882, %v1791
        %v1884 = vadd.f32 %v1883, %v1793
        %v1885 = vadd.f32 %v1884, %v1795
        %v1886 = vadd.f32 %v1885, %v1797
        %v1887 = vadd.f32 %v1886, %v1799
        %v1888 = vadd.f32 %v1887, %v1801
        %v1889 = vadd.f32 %v1888, %v1803
        %v1890 = vadd.f32 %v1889, %v1805
        %v1891 = vadd.f32 %v1890, %v1807
        %v1892 = vadd.f32 %v1891, %v1809
        %v1893 = vadd.f32 %v1892, %v1811
        %v1894 = vadd.f32 %v1893, %v1813
        %v1895 = vadd.f32 %v1894, %v1815
        %v1896 = vadd.f32 %v1895, %v1817
        %v1897 = vadd.f32 %v1896, %v1819
        %v1898 = vadd.f32 %v1897, %v1821
        %v1899 = vadd.f32 %v1898, %v1823
        %v1900 = vadd.f32 %v1899, %v1825
        %v1901 = vadd.f32 %v1900, %v1827
        %v1902 = vadd.f32 %v1901, %v1829
        %v1903 = vadd.f32 %v1902, %v1831
        %v1904 = vadd.f32 %v1903, %v1833
        %v1905 = vadd.f32 %v1904, %v1835
        %v1906 = vadd.f32 %v1905, %v1837
        %v1907 = vadd.f32 %v1906, %v1839
        %v1908 = vadd.f32 %v1907, %v1841
        %v1909 = vadd.f32 %v1908, %v1843
        %v1910 = vadd.f32 %v1909, %v1845
        %v1911 = vadd.f32 %v1910, %v1847
        %v1912 = vrot.slane %v1911, 4
        %v1913 = vadd.f32 %v1911, %v1912
        %v1914 = vrot.slane %v1913, 2
        %v1915 = vadd.f32 %v1913, %v1914
        %v1916 = vrot.slane %v1915, 1
        %v1917 = vadd.f32 %v1915, %v1916
        %v1918 = vadd.f32 %v1722, %v1724
        %v1919 = vadd.f32 %v1918, %v1726
        %v1920 = vadd.f32 %v1919, %v1728
        %v1921 = vadd.f32 %v1920, %v1730
        %v1922 = vadd.f32 %v1921, %v1732
        %v1923 = vadd.f32 %v1922, %v1734
        %v1924 = vadd.f32 %v1923, %v1736
        %v1925 = vadd.f32 %v1924, %v1738
        %v1926 = vadd.f32 %v1925, %v1740
        %v1927 = vadd.f32 %v1926, %v1742
        %v1928 = vadd.f32 %v1927, %v1744
        %v1929 = vadd.f32 %v1928, %v1746
        %v1930 = vadd.f32 %v1929, %v1748
        %v1931 = vadd.f32 %v1930, %v1750
        %v1932 = vadd.f32 %v1931, %v1752
        %v1933 = vadd.f32 %v1932, %v1754
        %v1934 = vadd.f32 %v1933, %v1756
        %v1935 = vadd.f32 %v1934, %v1758
        %v1936 = vadd.f32 %v1935, %v1760
        %v1937 = vadd.f32 %v1936, %v1762
        %v1938 = vadd.f32 %v1937, %v1764
        %v1939 = vadd.f32 %v1938, %v1766
        %v1940 = vadd.f32 %v1939, %v1768
        %v1941 = vadd.f32 %v1940, %v1770
        %v1942 = vadd.f32 %v1941, %v1772
        %v1943 = vadd.f32 %v1942, %v1774
        %v1944 = vadd.f32 %v1943, %v1776
        %v1945 = vadd.f32 %v1944, %v1778
        %v1946 = vadd.f32 %v1945, %v1780
        %v1947 = vadd.f32 %v1946, %v1782
        %v1948 = vadd.f32 %v1947, %v1784
        %v1949 = vadd.f32 %v1948, %v1786
        %v1950 = vadd.f32 %v1949, %v1788
        %v1951 = vadd.f32 %v1950, %v1790
        %v1952 = vadd.f32 %v1951, %v1792
        %v1953 = vadd.f32 %v1952, %v1794
        %v1954 = vadd.f32 %v1953, %v1796
        %v1955 = vadd.f32 %v1954, %v1798
        %v1956 = vadd.f32 %v1955, %v1800
        %v1957 = vadd.f32 %v1956, %v1802
        %v1958 = vadd.f32 %v1957, %v1804
        %v1959 = vadd.f32 %v1958, %v1806
        %v1960 = vadd.f32 %v1959, %v1808
        %v1961 = vadd.f32 %v1960, %v1810
        %v1962 = vadd.f32 %v1961, %v1812
        %v1963 = vadd.f32 %v1962, %v1814
        %v1964 = vadd.f32 %v1963, %v1816
        %v1965 = vadd.f32 %v1964, %v1818
        %v1966 = vadd.f32 %v1965, %v1820
        %v1967 = vadd.f32 %v1966, %v1822
        %v1968 = vadd.f32 %v1967, %v1824
        %v1969 = vadd.f32 %v1968, %v1826
        %v1970 = vadd.f32 %v1969, %v1828
        %v1971 = vadd.f32 %v1970, %v1830
        %v1972 = vadd.f32 %v1971, %v1832
        %v1973 = vadd.f32 %v1972, %v1834
        %v1974 = vadd.f32 %v1973, %v1836
        %v1975 = vadd.f32 %v1974, %v1838
        %v1976 = vadd.f32 %v1975, %v1840
        %v1977 = vadd.f32 %v1976, %v1842
        %v1978 = vadd.f32 %v1977, %v1844
        %v1979 = vadd.f32 %v1978, %v1846
        %v1980 = vadd.f32 %v1979, %v1848
        %v1981 = vrot.slane %v1980, 4
        %v1982 = vadd.f32 %v1980, %v1981
        %v1983 = vrot.slane %v1982, 2
        %v1984 = vadd.f32 %v1982, %v1983
        %v1985 = vrot.slane %v1984, 1
        %v1986 = vadd.f32 %v1984, %v1985
        %vm1987 = vcmask 1040384
        %v1988 = vsel %vm1987, %v1651, %v1917
        %v1989 = vsel %vm1987, %v1720, %v1986
        %v1992 = vcombine.low %v1988, %v1989
        %v1994 = vunpack.c.l.s4 1983009808
        %v1995 = vunpack.c.0.s8 %v1994
        %v1996 = vlaneseq
        %v1997 = vshrl.u32 %v1996, 7
        %v1998 = vsub.s32 %v1995, %v1997
        %v1999 = vrot.slane %v1992, %v1998
        %2001 = vst [vmem:[%s398] sm:$0xf] %v1999
        %v2002 = vadd.f32 %v1137, %v1140
        %v2003 = vadd.f32 %v2002, %v1145
        %v2004 = vadd.f32 %v2003, %v1148
        %v2005 = vadd.f32 %v2004, %v1153
        %v2006 = vadd.f32 %v2005, %v1156
        %v2007 = vadd.f32 %v2006, %v1161
        %v2008 = vadd.f32 %v2007, %v1164
        %v2009 = vadd.f32 %v2008, %v1169
        %v2010 = vadd.f32 %v2009, %v1172
        %v2011 = vadd.f32 %v2010, %v1177
        %v2012 = vadd.f32 %v2011, %v1180
        %v2013 = vadd.f32 %v2012, %v1185
        %v2014 = vadd.f32 %v2013, %v1188
        %v2015 = vadd.f32 %v2014, %v1193
        %v2016 = vadd.f32 %v2015, %v1196
        %v2017 = vadd.f32 %v2016, %v1201
        %v2018 = vadd.f32 %v2017, %v1204
        %v2019 = vadd.f32 %v2018, %v1209
        %v2020 = vadd.f32 %v2019, %v1212
        %v2021 = vadd.f32 %v2020, %v1217
        %v2022 = vadd.f32 %v2021, %v1220
        %v2023 = vadd.f32 %v2022, %v1225
        %v2024 = vadd.f32 %v2023, %v1228
        %v2025 = vadd.f32 %v2024, %v1233
        %v2026 = vadd.f32 %v2025, %v1236
        %v2027 = vadd.f32 %v2026, %v1241
        %v2028 = vadd.f32 %v2027, %v1244
        %v2029 = vadd.f32 %v2028, %v1249
        %v2030 = vadd.f32 %v2029, %v1252
        %v2031 = vadd.f32 %v2030, %v1257
        %v2032 = vadd.f32 %v2031, %v1260
        %v2033 = vadd.f32 %v2032, %v1265
        %v2034 = vadd.f32 %v2033, %v1268
        %v2035 = vadd.f32 %v2034, %v1273
        %v2036 = vadd.f32 %v2035, %v1276
        %v2037 = vadd.f32 %v2036, %v1281
        %v2038 = vadd.f32 %v2037, %v1284
        %v2039 = vadd.f32 %v2038, %v1289
        %v2040 = vadd.f32 %v2039, %v1292
        %v2041 = vadd.f32 %v2040, %v1297
        %v2042 = vadd.f32 %v2041, %v1300
        %v2043 = vadd.f32 %v2042, %v1305
        %v2044 = vadd.f32 %v2043, %v1308
        %v2045 = vadd.f32 %v2044, %v1313
        %v2046 = vadd.f32 %v2045, %v1316
        %v2047 = vadd.f32 %v2046, %v1321
        %v2048 = vadd.f32 %v2047, %v1324
        %v2049 = vadd.f32 %v2048, %v1329
        %v2050 = vadd.f32 %v2049, %v1332
        %v2051 = vadd.f32 %v2050, %v1337
        %v2052 = vadd.f32 %v2051, %v1340
        %v2053 = vadd.f32 %v2052, %v1345
        %v2054 = vadd.f32 %v2053, %v1348
        %v2055 = vadd.f32 %v2054, %v1353
        %v2056 = vadd.f32 %v2055, %v1356
        %v2057 = vadd.f32 %v2056, %v1361
        %v2058 = vadd.f32 %v2057, %v1364
        %v2059 = vadd.f32 %v2058, %v1369
        %v2060 = vadd.f32 %v2059, %v1372
        %v2061 = vadd.f32 %v2060, %v1377
        %v2062 = vadd.f32 %v2061, %v1380
        %v2063 = vadd.f32 %v2062, %v1385
        %v2064 = vadd.f32 %v2063, %v1388
        %v2065 = vrot.slane %v2064, 4
        %v2066 = vadd.f32 %v2064, %v2065
        %v2067 = vrot.slane %v2066, 2
        %v2068 = vadd.f32 %v2066, %v2067
        %v2069 = vrot.slane %v2068, 1
        %v2070 = vadd.f32 %v2068, %v2069
        %v2071 = vmul.f32 %v1137, %v1137
        %v2072 = vmul.f32 %v1140, %v1140
        %v2073 = vmul.f32 %v1145, %v1145
        %v2074 = vmul.f32 %v1148, %v1148
        %v2075 = vmul.f32 %v1153, %v1153
        %v2076 = vmul.f32 %v1156, %v1156
        %v2077 = vmul.f32 %v1161, %v1161
        %v2078 = vmul.f32 %v1164, %v1164
        %v2079 = vmul.f32 %v1169, %v1169
        %v2080 = vmul.f32 %v1172, %v1172
        %v2081 = vmul.f32 %v1177, %v1177
        %v2082 = vmul.f32 %v1180, %v1180
        %v2083 = vmul.f32 %v1185, %v1185
        %v2084 = vmul.f32 %v1188, %v1188
        %v2085 = vmul.f32 %v1193, %v1193
        %v2086 = vmul.f32 %v1196, %v1196
        %v2087 = vmul.f32 %v1201, %v1201
        %v2088 = vmul.f32 %v1204, %v1204
        %v2089 = vmul.f32 %v1209, %v1209
        %v2090 = vmul.f32 %v1212, %v1212
        %v2091 = vmul.f32 %v1217, %v1217
        %v2092 = vmul.f32 %v1220, %v1220
        %v2093 = vmul.f32 %v1225, %v1225
        %v2094 = vmul.f32 %v1228, %v1228
        %v2095 = vmul.f32 %v1233, %v1233
        %v2096 = vmul.f32 %v1236, %v1236
        %v2097 = vmul.f32 %v1241, %v1241
        %v2098 = vmul.f32 %v1244, %v1244
        %v2099 = vmul.f32 %v1249, %v1249
        %v2100 = vmul.f32 %v1252, %v1252
        %v2101 = vmul.f32 %v1257, %v1257
        %v2102 = vmul.f32 %v1260, %v1260
        %v2103 = vmul.f32 %v1265, %v1265
        %v2104 = vmul.f32 %v1268, %v1268
        %v2105 = vmul.f32 %v1273, %v1273
        %v2106 = vmul.f32 %v1276, %v1276
        %v2107 = vmul.f32 %v1281, %v1281
        %v2108 = vmul.f32 %v1284, %v1284
        %v2109 = vmul.f32 %v1289, %v1289
        %v2110 = vmul.f32 %v1292, %v1292
        %v2111 = vmul.f32 %v1297, %v1297
        %v2112 = vmul.f32 %v1300, %v1300
        %v2113 = vmul.f32 %v1305, %v1305
        %v2114 = vmul.f32 %v1308, %v1308
        %v2115 = vmul.f32 %v1313, %v1313
        %v2116 = vmul.f32 %v1316, %v1316
        %v2117 = vmul.f32 %v1321, %v1321
        %v2118 = vmul.f32 %v1324, %v1324
        %v2119 = vmul.f32 %v1329, %v1329
        %v2120 = vmul.f32 %v1332, %v1332
        %v2121 = vmul.f32 %v1337, %v1337
        %v2122 = vmul.f32 %v1340, %v1340
        %v2123 = vmul.f32 %v1345, %v1345
        %v2124 = vmul.f32 %v1348, %v1348
        %v2125 = vmul.f32 %v1353, %v1353
        %v2126 = vmul.f32 %v1356, %v1356
        %v2127 = vmul.f32 %v1361, %v1361
        %v2128 = vmul.f32 %v1364, %v1364
        %v2129 = vmul.f32 %v1369, %v1369
        %v2130 = vmul.f32 %v1372, %v1372
        %v2131 = vmul.f32 %v1377, %v1377
        %v2132 = vmul.f32 %v1380, %v1380
        %v2133 = vmul.f32 %v1385, %v1385
        %v2134 = vmul.f32 %v1388, %v1388
        %v2135 = vadd.f32 %v2071, %v2072
        %v2136 = vadd.f32 %v2135, %v2073
        %v2137 = vadd.f32 %v2136, %v2074
        %v2138 = vadd.f32 %v2137, %v2075
        %v2139 = vadd.f32 %v2138, %v2076
        %v2140 = vadd.f32 %v2139, %v2077
        %v2141 = vadd.f32 %v2140, %v2078
        %v2142 = vadd.f32 %v2141, %v2079
        %v2143 = vadd.f32 %v2142, %v2080
        %v2144 = vadd.f32 %v2143, %v2081
        %v2145 = vadd.f32 %v2144, %v2082
        %v2146 = vadd.f32 %v2145, %v2083
        %v2147 = vadd.f32 %v2146, %v2084
        %v2148 = vadd.f32 %v2147, %v2085
        %v2149 = vadd.f32 %v2148, %v2086
        %v2150 = vadd.f32 %v2149, %v2087
        %v2151 = vadd.f32 %v2150, %v2088
        %v2152 = vadd.f32 %v2151, %v2089
        %v2153 = vadd.f32 %v2152, %v2090
        %v2154 = vadd.f32 %v2153, %v2091
        %v2155 = vadd.f32 %v2154, %v2092
        %v2156 = vadd.f32 %v2155, %v2093
        %v2157 = vadd.f32 %v2156, %v2094
        %v2158 = vadd.f32 %v2157, %v2095
        %v2159 = vadd.f32 %v2158, %v2096
        %v2160 = vadd.f32 %v2159, %v2097
        %v2161 = vadd.f32 %v2160, %v2098
        %v2162 = vadd.f32 %v2161, %v2099
        %v2163 = vadd.f32 %v2162, %v2100
        %v2164 = vadd.f32 %v2163, %v2101
        %v2165 = vadd.f32 %v2164, %v2102
        %v2166 = vadd.f32 %v2165, %v2103
        %v2167 = vadd.f32 %v2166, %v2104
        %v2168 = vadd.f32 %v2167, %v2105
        %v2169 = vadd.f32 %v2168, %v2106
        %v2170 = vadd.f32 %v2169, %v2107
        %v2171 = vadd.f32 %v2170, %v2108
        %v2172 = vadd.f32 %v2171, %v2109
        %v2173 = vadd.f32 %v2172, %v2110
        %v2174 = vadd.f32 %v2173, %v2111
        %v2175 = vadd.f32 %v2174, %v2112
        %v2176 = vadd.f32 %v2175, %v2113
        %v2177 = vadd.f32 %v2176, %v2114
        %v2178 = vadd.f32 %v2177, %v2115
        %v2179 = vadd.f32 %v2178, %v2116
        %v2180 = vadd.f32 %v2179, %v2117
        %v2181 = vadd.f32 %v2180, %v2118
        %v2182 = vadd.f32 %v2181, %v2119
        %v2183 = vadd.f32 %v2182, %v2120
        %v2184 = vadd.f32 %v2183, %v2121
        %v2185 = vadd.f32 %v2184, %v2122
        %v2186 = vadd.f32 %v2185, %v2123
        %v2187 = vadd.f32 %v2186, %v2124
        %v2188 = vadd.f32 %v2187, %v2125
        %v2189 = vadd.f32 %v2188, %v2126
        %v2190 = vadd.f32 %v2189, %v2127
        %v2191 = vadd.f32 %v2190, %v2128
        %v2192 = vadd.f32 %v2191, %v2129
        %v2193 = vadd.f32 %v2192, %v2130
        %v2194 = vadd.f32 %v2193, %v2131
        %v2195 = vadd.f32 %v2194, %v2132
        %v2196 = vadd.f32 %v2195, %v2133
        %v2197 = vadd.f32 %v2196, %v2134
        %v2198 = vrot.slane %v2197, 4
        %v2199 = vadd.f32 %v2197, %v2198
        %v2200 = vrot.slane %v2199, 2
        %v2201 = vadd.f32 %v2199, %v2200
        %v2202 = vrot.slane %v2201, 1
        %v2203 = vadd.f32 %v2201, %v2202
        %v2204 = vsel %vm1987, %v2070, %v2203
        %2205 = vst [vmem:[%s405] sm:$0x3] %v2204
        %s2206 = sand.u32 %s152, 1
        %s2207 = scalar_lea.sflag [#allocation4], %s2206
        %s2208 = sand.u32 %s152, 1
        %s2209 = smul.addr %s2208, 1024
        %s2210 = scalar_lea.vmem [#allocation11], %s2209
        %s2211 = sand.u32 %s34, 1
        %s2212 = scalar_lea.sflag [#allocation13], %s2211
        %s2213 = sand.u32 %s178, 1
        %s2214 = smul.addr %s2213, 512
        %s2215 = scalar_lea.vmem [#allocation12], %s2214
        %s2216 = sand.u32 %s34, 1
        %s2217 = scalar_lea.sflag [#allocation13], %s2216
        %s2218 = sand.u32 %s204, 1
        %s2219 = smul.addr %s2218, 4
        %s2220 = scalar_lea.vmem [#allocation14], %s2219
        %s2221 = sand.u32 %s230, 1
        %s2222 = scalar_lea.sflag [#allocation16], %s2221
        %s2223 = sand.u32 %s230, 1
        %s2224 = smul.addr %s2223, 2
        %s2225 = scalar_lea.vmem [#allocation15], %s2224
        // Predicated region
        $region61: #{tpu_custom_call.1} parent=39 // pred_check
          %p2226 = pneg %p162
        $region62: #{tpu_custom_call.1} parent=39 // pred_check_branch
          %2228 = sbr.rel (%p2226) target = $region64
        $region63: #{tpu_custom_call.1} parent=39 // pred_region
          %s2229 = smul.u32 64, %s34
          %s2231 = ssub.s32 16384, 16384
          %2232 = vsyncadd %s2207, %s2231
          %s2233 = smul.addr %s2229, 2
          %s2234 = smul.addr %s2233, 128
          %s2235 = scalar_lea.hbm %s5, %s2234
          %s2236 = sshll.u32 %s2210, 4
          %s2237 = int_to_ptr.vmem [resolvable:$true] %s2236
          %2242 = dma.vmem_to_hbm [thread:$0]  %s2237, 16384, %s2235, %s2207, 256, 256, 16
        $region64: #{tpu_custom_call.1} parent=39 // pred_fallthru
          _
        // Predicated region
        $region65: #{tpu_custom_call.1} parent=39 // pred_check
          %p2243 = pneg %p188
        $region66: #{tpu_custom_call.1} parent=39 // pred_check_branch
          %2245 = sbr.rel (%p2243) target = $region68
        $region67: #{tpu_custom_call.1} parent=39 // pred_region
          %s2246 = smul.u32 64, %s34
          %s2248 = ssub.s32 8192, 8192
          %2249 = vsyncadd %s2212, %s2248
          %s2250 = smul.addr %s2246, 128
          %s2251 = scalar_lea.hbm %s6, %s2250
          %s2252 = sshll.u32 %s2215, 4
          %s2253 = int_to_ptr.vmem [resolvable:$true] %s2252
          %2258 = dma.vmem_to_hbm [thread:$0]  %s2253, 8192, %s2251, %s2212, 128, 128, 8
        $region68: #{tpu_custom_call.1} parent=39 // pred_fallthru
          _
        // Predicated region
        $region69: #{tpu_custom_call.1} parent=39 // pred_check
          %p2259 = pneg %p214
        $region70: #{tpu_custom_call.1} parent=39 // pred_check_branch
          %2261 = sbr.rel (%p2259) target = $region72
        $region71: #{tpu_custom_call.1} parent=39 // pred_region
          %s2263 = ssub.s32 64, 64
          %2264 = vsyncadd %s2217, %s2263
          %s2265 = smul.addr %s34, 2
          %s2266 = smul.addr %s2265, 32
          %s2267 = scalar_lea.hbm %s7, %s2266
          %s2269 = sshll.u32 %s2220, 4
          %s2270 = int_to_ptr.vmem [resolvable:$true] %s2269
          %2272 = dma.vmem_to_hbm [thread:$0]  %s2270, 64, %s2267, %s2217
        $region72: #{tpu_custom_call.1} parent=39 // pred_fallthru
          _
        // Predicated region
        $region73: #{tpu_custom_call.1} parent=39 // pred_check
          %p2273 = pneg %p240
        $region74: #{tpu_custom_call.1} parent=39 // pred_check_branch
          %2275 = sbr.rel (%p2273) target = $region76
        $region75: #{tpu_custom_call.1} parent=39 // pred_region
          %s2277 = ssub.s32 32, 32
          %2278 = vsyncadd %s2222, %s2277
          %s2279 = smul.addr %s34, 32
          %s2280 = scalar_lea.hbm %s8, %s2279
          %s2282 = sshll.u32 %s2225, 4
          %s2283 = int_to_ptr.vmem [resolvable:$true] %s2282
          %2285 = dma.vmem_to_hbm [thread:$0]  %s2283, 32, %s2280, %s2222
        $region76: #{tpu_custom_call.1} parent=39 // pred_fallthru
          _
      $region40: #{tpu_custom_call.1} parent=5 // pred_fallthru
        _
      %p2286 = scmp.le.s32.totalorder 2, %s29
      // Predicated region
      $region77: #{tpu_custom_call.1} parent=5 // pred_check
        %p2287 = pneg %p2286
      $region78: #{tpu_custom_call.1} parent=5 // pred_check_branch
        %2289 = sbr.rel (%p2287) target = $region80
      $region79: #{tpu_custom_call.1} parent=5 // pred_region
        %s2290 = ssub.s32 %s29, 2
        // Predicated region
        $region81: #{tpu_custom_call.1} parent=79 // pred_check
          %p2291 = pneg %p168
        $region82: #{tpu_custom_call.1} parent=79 // pred_check_branch
          %2293 = sbr.rel (%p2291) target = $region84
        $region83: #{tpu_custom_call.1} parent=79 // pred_region
          %s2294 = sand.u32 %s153, 1
          %s2295 = scalar_lea.sflag [#allocation4], %s2294
          %s2296 = sand.u32 %s153, 1
          %s2297 = smul.addr %s2296, 1024
          %s2298 = scalar_lea.vmem [#allocation11], %s2297
          %2299 = dma.done %s2295, 16384
        $region84: #{tpu_custom_call.1} parent=79 // pred_fallthru
          _
        // Predicated region
        $region85: #{tpu_custom_call.1} parent=79 // pred_check
          %p2300 = pneg %p194
        $region86: #{tpu_custom_call.1} parent=79 // pred_check_branch
          %2302 = sbr.rel (%p2300) target = $region88
        $region87: #{tpu_custom_call.1} parent=79 // pred_region
          %s2303 = sand.u32 %s35, 1
          %s2304 = scalar_lea.sflag [#allocation13], %s2303
          %s2305 = sand.u32 %s179, 1
          %s2306 = smul.addr %s2305, 512
          %s2307 = scalar_lea.vmem [#allocation12], %s2306
          %2308 = dma.done %s2304, 8192
        $region88: #{tpu_custom_call.1} parent=79 // pred_fallthru
          _
        // Predicated region
        $region89: #{tpu_custom_call.1} parent=79 // pred_check
          %p2309 = pneg %p220
        $region90: #{tpu_custom_call.1} parent=79 // pred_check_branch
          %2311 = sbr.rel (%p2309) target = $region92
        $region91: #{tpu_custom_call.1} parent=79 // pred_region
          %s2312 = sand.u32 %s35, 1
          %s2313 = scalar_lea.sflag [#allocation13], %s2312
          %s2314 = sand.u32 %s205, 1
          %s2315 = smul.addr %s2314, 4
          %s2316 = scalar_lea.vmem [#allocation14], %s2315
          %2317 = dma.done %s2313, 64
        $region92: #{tpu_custom_call.1} parent=79 // pred_fallthru
          _
        // Predicated region
        $region93: #{tpu_custom_call.1} parent=79 // pred_check
          %p2318 = pneg %p246
        $region94: #{tpu_custom_call.1} parent=79 // pred_check_branch
          %2320 = sbr.rel (%p2318) target = $region96
        $region95: #{tpu_custom_call.1} parent=79 // pred_region
          %s2321 = sand.u32 %s231, 1
          %s2322 = scalar_lea.sflag [#allocation16], %s2321
          %s2323 = sand.u32 %s231, 1
          %s2324 = smul.addr %s2323, 2
          %s2325 = scalar_lea.vmem [#allocation15], %s2324
          %2326 = dma.done %s2322, 32
        $region96: #{tpu_custom_call.1} parent=79 // pred_fallthru
          _
      $region80: #{tpu_custom_call.1} parent=5 // pred_fallthru
        _
    $region6: #{tpu_custom_call.1} parent=1 // loop_footer
      %s33 = sadd.s32 1, %s29
    $region7: #{tpu_custom_call.1} parent=1 // loop_footer_branch
      %28 = sbr.rel target = $region3
    $region8: #{tpu_custom_call.1} parent=1 // loop_exit
      _
    %2327 = vsyncpa [#allocation3], 1
    %s2328 = scalar_lea.sflag [#allocation3], 1
    %2329 = vsyncpa %s2328, 1
    %2330 = vsyncpa [#allocation6], 1
    %2331 = vsyncpa [#allocation9], 1
    %2332 = vsyncpa [#allocation4], 1
    %s2333 = scalar_lea.sflag [#allocation4], 1
    %2334 = vsyncpa %s2333, 1
    %2335 = vsyncpa [#allocation13], 1
    %s2336 = scalar_lea.sflag [#allocation13], 1
    %2337 = vsyncpa %s2336, 1
    %2338 = vsyncpa [#allocation16], 1
    %s2339 = scalar_lea.sflag [#allocation16], 1
    %2340 = vsyncpa %s2339, 1

</llo_original>
